<compile_context>
chip_gen: v6e
topology: v6e:2x2x1
jax: 0.10.0
libtpu: 0.0.40
codegen_flags: <defaults>
</compile_context>

<pallas_src>
import functools

import jax
import jax.numpy as jnp
import numpy as np
from jax.experimental import pallas as pl
from jax.experimental.pallas import tpu as pltpu


def _round_up(x, m):
    return ((x + m - 1) // m) * m


def _max_and_first_argmax(x, axis):
    """max over `axis` and the index of the FIRST occurrence of the max (torch.max semantics)."""
    ax = axis if axis >= 0 else x.ndim + axis
    m = jnp.max(x, axis=ax, keepdims=True)
    iota = jax.lax.broadcasted_iota(jnp.int32, x.shape, ax)
    idx = jnp.min(jnp.where(x == m, iota, jnp.int32(2 ** 30)), axis=ax)
    return jnp.squeeze(m, axis=ax), idx


# --------------------------------------------------------------------------- #
# Kernel 1: per-query softmax + mask projections (reads pred masks once)
# --------------------------------------------------------------------------- #
def pred_proj_kernel(logits_ref, masks_ref,
                     prob_ref, projx_ref, idxx_ref, projy_ref, idxy_ref):
    logits = logits_ref[0]                                  # (Qt, NC)
    z = logits - jnp.max(logits, axis=-1, keepdims=True)
    e = jnp.exp(z)
    prob_ref[0] = e / jnp.sum(e, axis=-1, keepdims=True)

    m = masks_ref[0]                                        # (Qt, H, W)
    mx, ix = _max_and_first_argmax(m, axis=-1)              # (Qt, H)
    projx_ref[0] = jax.nn.sigmoid(mx)
    idxx_ref[0] = ix.astype(jnp.float32)
    my, iy = _max_and_first_argmax(m, axis=-2)              # (Qt, W)
    projy_ref[0] = jax.nn.sigmoid(my)
    idxy_ref[0] = iy.astype(jnp.float32)


# --------------------------------------------------------------------------- #
# Kernel 2: per-target box-mask projections (reads box masks once)
# --------------------------------------------------------------------------- #
def box_proj_kernel(boxm_ref, tpx_ref, tpy_ref):
    bm = boxm_ref[0]                                        # (Gt, H, W)
    tpx_ref[0] = jnp.max(bm, axis=-1)                       # (Gt, H)
    tpy_ref[0] = jnp.max(bm, axis=-2)                       # (Gt, W)


# --------------------------------------------------------------------------- #
# Kernel 3: matching cost matrix (class matmul + two masked projection dices)
# --------------------------------------------------------------------------- #
def matcher_cost_kernel(prob_ref, onehot_t_ref,
                        projx_ref, idxx_ref, projy_ref, idxy_ref,
                        tpx_ref, left_ref, right_ref,
                        tpy_ref, top_ref, bot_ref,
                        cost_ref, *, cost_class_w, cost_proj_w):
    # ---- classification cost: -softmax(logits) @ onehot^T  (plain MXU matmul)
    cost_cls = -jax.lax.dot_general(
        prob_ref[0], onehot_t_ref[0], (((1,), (0,)), ((), ())),
        preferred_element_type=jnp.float32)                 # (Qt, Gt)

    proj_x = projx_ref[0]                                   # (Qt, H)
    idx_x = idxx_ref[0]
    proj_y = projy_ref[0]                                   # (Qt, W)
    idx_y = idxy_ref[0]

    tpx = tpx_ref[0]                                        # (Gt, H)
    left = left_ref[0]
    right = right_ref[0]
    tpy = tpy_ref[0]                                        # (Gt, W)
    top = top_ref[0]
    bot = bot_ref[0]

    # ---- projection dice along W (axis=-1): per-row projections, column bounds
    flag_x = jnp.logical_and(idx_x[:, None, :] >= left[None],
                             idx_x[:, None, :] < right[None])        # (Qt, Gt, H)
    tgt_eff_x = jnp.where(flag_x, tpx[None], 0.0)                    # (Qt, Gt, H)
    num_x = 2.0 * jnp.sum(proj_x[:, None, :] * tgt_eff_x, axis=-1)   # (Qt, Gt)
    den_x = jnp.sum(proj_x, axis=-1)[:, None] + jnp.sum(tgt_eff_x, axis=-1)
    cost_x = 1.0 - (num_x + 1.0) / (den_x + 1.0)

    # ---- projection dice along H (axis=-2): per-column projections, row bounds
    flag_y = jnp.logical_and(idx_y[:, None, :] >= top[None],
                             idx_y[:, None, :] < bot[None])          # (Qt, Gt, W)
    tgt_eff_y = jnp.where(flag_y, tpy[None], 0.0)
    num_y = 2.0 * jnp.sum(proj_y[:, None, :] * tgt_eff_y, axis=-1)
    den_y = jnp.sum(proj_y, axis=-1)[:, None] + jnp.sum(tgt_eff_y, axis=-1)
    cost_y = 1.0 - (num_y + 1.0) / (den_y + 1.0)

    cost_ref[0] = (cost_class_w * cost_cls
                   + cost_proj_w * (cost_x + cost_y)).astype(cost_ref.dtype)


def hungarian_matcher_proj_costs(pred_logits, pred_masks, labels, box_masks,
                                 left_bounds, right_bounds, top_bounds, bottom_bounds,
                                 cost_class=1.0, cost_projection=1.0, q_tile=None):
    """Returns the per-batch matching cost matrices, shape (B, Q, G)."""
    B, Q, NC = pred_logits.shape
    G = labels.shape[1]
    H, W = pred_masks.shape[-2:]
    f32 = jnp.float32

    MASK_BLOCK_BYTES = 4 * 1024 * 1024      # cap per-tile (N, H, W) mask block size
    G_TILE = 128                            # lane-dense output / G tile size
    Gp = _round_up(G, G_TILE)

    if q_tile is None:
        q_tile = min(64, _round_up(Q, 8))
    q_tile = max(8, _round_up(q_tile, 8))
    while q_tile > 8 and q_tile * H * W * 4 > MASK_BLOCK_BYTES:
        q_tile //= 2
    Qp = _round_up(Q, q_tile)

    g_proj_tile = G_TILE
    while g_proj_tile > 8 and g_proj_tile * H * W * 4 > MASK_BLOCK_BYTES:
        g_proj_tile //= 2

    logits = pred_logits.astype(f32)
    masks = pred_masks.astype(f32)
    if Qp != Q:
        pq = Qp - Q
        logits = jnp.pad(logits, ((0, 0), (0, pq), (0, 0)))
        masks = jnp.pad(masks, ((0, 0), (0, pq), (0, 0), (0, 0)))

    # glue: one-hot of labels, pre-transposed to (B, NC, G) so the class gather
    # becomes a plain matmul; pad G to a multiple of 128 (lane-dense).
    onehot_t = jnp.swapaxes(jax.nn.one_hot(labels, NC, dtype=f32), 1, 2)   # (B, NC, G)
    boxm = box_masks.astype(f32)
    lb = left_bounds.astype(f32)
    rb = right_bounds.astype(f32)
    tb = top_bounds.astype(f32)
    bb = bottom_bounds.astype(f32)
    if Gp != G:
        pg = Gp - G
        onehot_t = jnp.pad(onehot_t, ((0, 0), (0, 0), (0, pg)))
        boxm = jnp.pad(boxm, ((0, 0), (0, pg), (0, 0), (0, 0)))
        lb = jnp.pad(lb, ((0, 0), (0, pg), (0, 0)))
        rb = jnp.pad(rb, ((0, 0), (0, pg), (0, 0)))
        tb = jnp.pad(tb, ((0, 0), (0, pg), (0, 0)))
        bb = jnp.pad(bb, ((0, 0), (0, pg), (0, 0)))

    cparams = pltpu.CompilerParams(
        dimension_semantics=("parallel", "parallel"),
        vmem_limit_bytes=64 * 1024 * 1024,
    )

    # ---- pass 1: per-query softmax + mask projections (masks read once)
    prob, proj_x, idx_x, proj_y, idx_y = pl.pallas_call(
        pred_proj_kernel,
        out_shape=(
            jax.ShapeDtypeStruct((B, Qp, NC), f32),
            jax.ShapeDtypeStruct((B, Qp, H), f32),
            jax.ShapeDtypeStruct((B, Qp, H), f32),
            jax.ShapeDtypeStruct((B, Qp, W), f32),
            jax.ShapeDtypeStruct((B, Qp, W), f32),
        ),
        grid_spec=pltpu.PrefetchScalarGridSpec(
            num_scalar_prefetch=0,
            grid=(B, Qp // q_tile),
            in_specs=[
                pl.BlockSpec((1, q_tile, NC), lambda b, q: (b, q, 0)),
                pl.BlockSpec((1, q_tile, H, W), lambda b, q: (b, q, 0, 0)),
            ],
            out_specs=[
                pl.BlockSpec((1, q_tile, NC), lambda b, q: (b, q, 0)),
                pl.BlockSpec((1, q_tile, H), lambda b, q: (b, q, 0)),
                pl.BlockSpec((1, q_tile, H), lambda b, q: (b, q, 0)),
                pl.BlockSpec((1, q_tile, W), lambda b, q: (b, q, 0)),
                pl.BlockSpec((1, q_tile, W), lambda b, q: (b, q, 0)),
            ],
        ),
        compiler_params=cparams,
    )(logits, masks)

    # ---- pass 2: per-target box-mask projections (box masks read once)
    tgt_px, tgt_py = pl.pallas_call(
        box_proj_kernel,
        out_shape=(
            jax.ShapeDtypeStruct((B, Gp, H), f32),
            jax.ShapeDtypeStruct((B, Gp, W), f32),
        ),
        grid_spec=pltpu.PrefetchScalarGridSpec(
            num_scalar_prefetch=0,
            grid=(B, Gp // g_proj_tile),
            in_specs=[
                pl.BlockSpec((1, g_proj_tile, H, W), lambda b, g: (b, g, 0, 0)),
            ],
            out_specs=[
                pl.BlockSpec((1, g_proj_tile, H), lambda b, g: (b, g, 0)),
                pl.BlockSpec((1, g_proj_tile, W), lambda b, g: (b, g, 0)),
            ],
        ),
        compiler_params=cparams,
    )(boxm)

    # ---- pass 3: cost matrix over (B, Q tiles, G tiles) -- only small arrays in VMEM
    kernel = functools.partial(matcher_cost_kernel,
                               cost_class_w=float(cost_class),
                               cost_proj_w=float(cost_projection))

    grid = (B, Qp // q_tile, Gp // G_TILE)
    in_specs = [
        pl.BlockSpec((1, q_tile, NC), lambda b, q, g: (b, q, 0)),      # softmax probs
        pl.BlockSpec((1, NC, G_TILE), lambda b, q, g: (b, 0, g)),      # one-hot^T
        pl.BlockSpec((1, q_tile, H), lambda b, q, g: (b, q, 0)),       # proj_x
        pl.BlockSpec((1, q_tile, H), lambda b, q, g: (b, q, 0)),       # idx_x
        pl.BlockSpec((1, q_tile, W), lambda b, q, g: (b, q, 0)),       # proj_y
        pl.BlockSpec((1, q_tile, W), lambda b, q, g: (b, q, 0)),       # idx_y
        pl.BlockSpec((1, G_TILE, H), lambda b, q, g: (b, g, 0)),       # tgt proj x
        pl.BlockSpec((1, G_TILE, H), lambda b, q, g: (b, g, 0)),       # left bounds
        pl.BlockSpec((1, G_TILE, H), lambda b, q, g: (b, g, 0)),       # right bounds
        pl.BlockSpec((1, G_TILE, W), lambda b, q, g: (b, g, 0)),       # tgt proj y
        pl.BlockSpec((1, G_TILE, W), lambda b, q, g: (b, g, 0)),       # top bounds
        pl.BlockSpec((1, G_TILE, W), lambda b, q, g: (b, g, 0)),       # bottom bounds
    ]
    out_specs = pl.BlockSpec((1, q_tile, G_TILE), lambda b, q, g: (b, q, g))

    cost_padded = pl.pallas_call(
        kernel,
        out_shape=jax.ShapeDtypeStruct((B, Qp, Gp), f32),
        grid_spec=pltpu.PrefetchScalarGridSpec(
            num_scalar_prefetch=0,
            grid=grid,
            in_specs=in_specs,
            out_specs=out_specs,
        ),
        compiler_params=pltpu.CompilerParams(
            dimension_semantics=("parallel", "parallel", "parallel"),
            vmem_limit_bytes=64 * 1024 * 1024,
        ),
    )(prob, onehot_t, proj_x, idx_x, proj_y, idx_y, tgt_px, lb, rb, tgt_py, tb, bb)

    return cost_padded[:, :Q, :G]


# ----------------------------------------------------------------------------
# pure-JAX reference of the PyTorch math, for a correctness check
# ----------------------------------------------------------------------------
def _ref_axis_projection(out_mask, tgt_boxmask, first_b, second_b, axis):
    sig = jax.nn.sigmoid(out_mask)
    proj = jnp.max(sig, axis=axis)
    idx = jnp.argmax(sig, axis=axis).astype(jnp.float32)
    tgt_proj = jnp.max(tgt_boxmask, axis=axis)
    flag = (idx[:, None, :] >= first_b[None]) & (idx[:, None, :] < second_b[None])
    tgt_eff = tgt_proj[None] * flag.astype(jnp.float32)
    num = 2.0 * jnp.sum(proj[:, None, :] * tgt_eff, axis=-1)
    den = jnp.sum(proj, axis=-1)[:, None] + jnp.sum(tgt_eff, axis=-1)
    return 1.0 - (num + 1.0) / (den + 1.0)


def _ref_costs(pred_logits, pred_masks, labels, box_masks,
               left_b, right_b, top_b, bot_b, cc, cp):
    outs = []
    for b in range(pred_logits.shape[0]):
        prob = jax.nn.softmax(pred_logits[b], axis=-1)
        cost_cls = -prob[:, labels[b]]
        cx = _ref_axis_projection(pred_masks[b], box_masks[b], left_b[b], right_b[b], -1)
        cy = _ref_axis_projection(pred_masks[b], box_masks[b], top_b[b], bot_b[b], -2)
        outs.append(cc * cost_cls + cp * (cx + cy))
    return jnp.stack(outs)


if __name__ == "__main__":
    B, Q, NC, G, H, W = 2, 8, 8, 4, 16, 16
    key = jax.random.PRNGKey(0)
    k1, k2, k3, k4, k5, k6, k7 = jax.random.split(key, 7)

    pred_logits = jax.random.normal(k1, (B, Q, NC), dtype=jnp.float32)
    pred_masks = jax.random.normal(k2, (B, Q, H, W), dtype=jnp.float32)
    labels = jax.random.randint(k3, (B, G), 0, NC, dtype=jnp.int32)

    # deterministic synthetic target boxes
    x0 = jax.random.randint(k4, (B, G), 0, W // 2)
    x1 = x0 + jax.random.randint(k5, (B, G), 1, W // 2)
    y0 = jax.random.randint(k6, (B, G), 0, H // 2)
    y1 = y0 + jax.random.randint(k7, (B, G), 1, H // 2)

    rows = jnp.arange(H)
    cols = jnp.arange(W)
    in_rows = (rows[None, None, :] >= y0[..., None]) & (rows[None, None, :] < y1[..., None])  # (B,G,H)
    in_cols = (cols[None, None, :] >= x0[..., None]) & (cols[None, None, :] < x1[..., None])  # (B,G,W)
    box_masks = (in_rows[..., :, None] & in_cols[..., None, :]).astype(jnp.float32)           # (B,G,H,W)

    left_bounds = jnp.broadcast_to(x0[..., None], (B, G, H)).astype(jnp.float32)
    right_bounds = jnp.broadcast_to(x1[..., None], (B, G, H)).astype(jnp.float32)
    top_bounds = jnp.broadcast_to(y0[..., None], (B, G, W)).astype(jnp.float32)
    bottom_bounds = jnp.broadcast_to(y1[..., None], (B, G, W)).astype(jnp.float32)

    cost = hungarian_matcher_proj_costs(
        pred_logits, pred_masks, labels, box_masks,
        left_bounds, right_bounds, top_bounds, bottom_bounds,
        cost_class=1.0, cost_projection=1.0)
    cost = jax.block_until_ready(cost)

    ref = _ref_costs(pred_logits, pred_masks, labels, box_masks,
                     left_bounds, right_bounds, top_bounds, bottom_bounds, 1.0, 1.0)
    np.testing.assert_allclose(np.asarray(cost), np.asarray(ref), rtol=1e-5, atol=1e-5)

    print("KERNEL_OK")
</pallas_src>

<mosaic_0001>
module attributes {stable_mosaic.version = 11 : i64} {
  func.func @pred_proj_kernel(%arg0: i32, %arg1: i32, %arg2: memref<1x8x8xf32, #tpu.memory_space<vmem>>, %arg3: memref<1x8x16x16xf32, #tpu.memory_space<vmem>>, %arg4: memref<1x8x8xf32, #tpu.memory_space<vmem>>, %arg5: memref<1x8x16xf32, #tpu.memory_space<vmem>>, %arg6: memref<1x8x16xf32, #tpu.memory_space<vmem>>, %arg7: memref<1x8x16xf32, #tpu.memory_space<vmem>>, %arg8: memref<1x8x16xf32, #tpu.memory_space<vmem>>) attributes {dimension_semantics = [#tpu.dimension_semantics<parallel>, #tpu.dimension_semantics<parallel>], iteration_bounds = array<i64: 2, 1>, scalar_prefetch = 0 : i64, scratch_operands = 0 : i64, tpu.core_type = #tpu.core_type<tc>, window_params = [{transform_indices = @transform_0, window_bounds = array<i64: 1, 8, 8>}, {transform_indices = @transform_1, window_bounds = array<i64: 1, 8, 16, 16>}, {transform_indices = @transform_2, window_bounds = array<i64: 1, 8, 8>}, {transform_indices = @transform_3, window_bounds = array<i64: 1, 8, 16>}, {transform_indices = @transform_4, window_bounds = array<i64: 1, 8, 16>}, {transform_indices = @transform_5, window_bounds = array<i64: 1, 8, 16>}, {transform_indices = @transform_6, window_bounds = array<i64: 1, 8, 16>}]} {
    %c0 = arith.constant 0 : index
    %c0_0 = arith.constant 0 : index
    %c0_1 = arith.constant 0 : index
    %0 = vector.load %arg2[%c0, %c0_0, %c0_1] : memref<1x8x8xf32, #tpu.memory_space<vmem>>, vector<1x8x8xf32>
    %1 = vector.shape_cast %0 : vector<1x8x8xf32> to vector<8x8xf32>
    %cst = arith.constant dense<0xFF800000> : vector<8xf32>
    %2 = vector.multi_reduction <maximumf>, %1, %cst [1] : vector<8x8xf32> to vector<8xf32>
    %3 = vector.shape_cast %2 : vector<8xf32> to vector<8x1xf32>
    %4 = vector.broadcast %3 : vector<8x1xf32> to vector<8x8xf32>
    %5 = arith.subf %1, %4 : vector<8x8xf32>
    %6 = math.exp %5 : vector<8x8xf32>
    %cst_2 = arith.constant dense<0.000000e+00> : vector<8xf32>
    %7 = vector.multi_reduction <add>, %6, %cst_2 [1] : vector<8x8xf32> to vector<8xf32>
    %8 = vector.shape_cast %7 : vector<8xf32> to vector<8x1xf32>
    %9 = vector.broadcast %8 : vector<8x1xf32> to vector<8x8xf32>
    %10 = arith.divf %6, %9 : vector<8x8xf32>
    %c0_3 = arith.constant 0 : index
    %c0_4 = arith.constant 0 : index
    %c0_5 = arith.constant 0 : index
    %11 = vector.load %arg4[%c0_3, %c0_4, %c0_5] : memref<1x8x8xf32, #tpu.memory_space<vmem>>, vector<1x8x8xf32>
    %12 = vector.shape_cast %11 : vector<1x8x8xf32> to vector<8x8xf32>
    %13 = vector.shape_cast %10 : vector<8x8xf32> to vector<1x8x8xf32>
    tpu.vector_store %arg4[%c0_3, %c0_4, %c0_5], %13 {strides = array<i32>} : memref<1x8x8xf32, #tpu.memory_space<vmem>>, vector<1x8x8xf32>,
    %c0_6 = arith.constant 0 : index
    %c0_7 = arith.constant 0 : index
    %c0_8 = arith.constant 0 : index
    %c0_9 = arith.constant 0 : index
    %14 = vector.load %arg3[%c0_6, %c0_7, %c0_8, %c0_9] : memref<1x8x16x16xf32, #tpu.memory_space<vmem>>, vector<1x8x16x16xf32>
    %15 = vector.shape_cast %14 : vector<1x8x16x16xf32> to vector<8x16x16xf32>
    %cst_10 = arith.constant dense<0xFF800000> : vector<8x16xf32>
    %16 = vector.multi_reduction <maximumf>, %15, %cst_10 [2] : vector<8x16x16xf32> to vector<8x16xf32>
    %17 = vector.shape_cast %16 : vector<8x16xf32> to vector<8x16x1xf32>
    %18 = tpu.iota {dimensions = array<i32: 2>} : vector<8x16x16xi32>
    %19 = vector.broadcast %17 : vector<8x16x1xf32> to vector<8x16x16xf32>
    %20 = arith.cmpf oeq, %15, %19 : vector<8x16x16xf32>
    %c1073741824_i32 = arith.constant 1073741824 : i32
    %21 = vector.broadcast %c1073741824_i32 : i32 to vector<8x16x16xi32>
    %22 = arith.select %20, %18, %21 : vector<8x16x16xi1>, vector<8x16x16xi32>
    %cst_11 = arith.constant dense<2147483647> : vector<8x16xi32>
    %23 = vector.multi_reduction <minsi>, %22, %cst_11 [2] : vector<8x16x16xi32> to vector<8x16xi32>
    %24 = vector.shape_cast %17 : vector<8x16x1xf32> to vector<8x16xf32>
    %25 = arith.negf %24 : vector<8x16xf32>
    %26 = math.exp %25 : vector<8x16xf32>
    %cst_12 = arith.constant 1.000000e+00 : f32
    %27 = vector.broadcast %cst_12 : f32 to vector<8x16xf32>
    %28 = arith.addf %27, %26 : vector<8x16xf32>
    %29 = arith.divf %27, %28 : vector<8x16xf32>
    %c0_13 = arith.constant 0 : index
    %c0_14 = arith.constant 0 : index
    %c0_15 = arith.constant 0 : index
    %30 = vector.load %arg5[%c0_13, %c0_14, %c0_15] : memref<1x8x16xf32, #tpu.memory_space<vmem>>, vector<1x8x16xf32>
    %31 = vector.shape_cast %30 : vector<1x8x16xf32> to vector<8x16xf32>
    %32 = vector.shape_cast %29 : vector<8x16xf32> to vector<1x8x16xf32>
    tpu.vector_store %arg5[%c0_13, %c0_14, %c0_15], %32 {strides = array<i32>} : memref<1x8x16xf32, #tpu.memory_space<vmem>>, vector<1x8x16xf32>,
    %33 = arith.sitofp %23 : vector<8x16xi32> to vector<8x16xf32>
    %c0_16 = arith.constant 0 : index
    %c0_17 = arith.constant 0 : index
    %c0_18 = arith.constant 0 : index
    %34 = vector.load %arg6[%c0_16, %c0_17, %c0_18] : memref<1x8x16xf32, #tpu.memory_space<vmem>>, vector<1x8x16xf32>
    %35 = vector.shape_cast %34 : vector<1x8x16xf32> to vector<8x16xf32>
    %36 = vector.shape_cast %33 : vector<8x16xf32> to vector<1x8x16xf32>
    tpu.vector_store %arg6[%c0_16, %c0_17, %c0_18], %36 {strides = array<i32>} : memref<1x8x16xf32, #tpu.memory_space<vmem>>, vector<1x8x16xf32>,
    %cst_19 = arith.constant dense<0xFF800000> : vector<8x16xf32>
    %37 = vector.multi_reduction <maximumf>, %15, %cst_19 [1] : vector<8x16x16xf32> to vector<8x16xf32>
    %38 = vector.shape_cast %37 : vector<8x16xf32> to vector<8x1x16xf32>
    %39 = tpu.iota {dimensions = array<i32: 1>} : vector<8x16x16xi32>
    %40 = vector.broadcast %38 : vector<8x1x16xf32> to vector<8x16x16xf32>
    %41 = arith.cmpf oeq, %15, %40 : vector<8x16x16xf32>
    %c1073741824_i32_20 = arith.constant 1073741824 : i32
    %42 = vector.broadcast %c1073741824_i32_20 : i32 to vector<8x16x16xi32>
    %43 = arith.select %41, %39, %42 : vector<8x16x16xi1>, vector<8x16x16xi32>
    %cst_21 = arith.constant dense<2147483647> : vector<8x16xi32>
    %44 = vector.multi_reduction <minsi>, %43, %cst_21 [1] : vector<8x16x16xi32> to vector<8x16xi32>
    %45 = vector.shape_cast %38 : vector<8x1x16xf32> to vector<8x16xf32>
    %46 = arith.negf %45 : vector<8x16xf32>
    %47 = math.exp %46 : vector<8x16xf32>
    %cst_22 = arith.constant 1.000000e+00 : f32
    %48 = vector.broadcast %cst_22 : f32 to vector<8x16xf32>
    %49 = arith.addf %48, %47 : vector<8x16xf32>
    %50 = arith.divf %48, %49 : vector<8x16xf32>
    %c0_23 = arith.constant 0 : index
    %c0_24 = arith.constant 0 : index
    %c0_25 = arith.constant 0 : index
    %51 = vector.load %arg7[%c0_23, %c0_24, %c0_25] : memref<1x8x16xf32, #tpu.memory_space<vmem>>, vector<1x8x16xf32>
    %52 = vector.shape_cast %51 : vector<1x8x16xf32> to vector<8x16xf32>
    %53 = vector.shape_cast %50 : vector<8x16xf32> to vector<1x8x16xf32>
    tpu.vector_store %arg7[%c0_23, %c0_24, %c0_25], %53 {strides = array<i32>} : memref<1x8x16xf32, #tpu.memory_space<vmem>>, vector<1x8x16xf32>,
    %54 = arith.sitofp %44 : vector<8x16xi32> to vector<8x16xf32>
    %c0_26 = arith.constant 0 : index
    %c0_27 = arith.constant 0 : index
    %c0_28 = arith.constant 0 : index
    %55 = vector.load %arg8[%c0_26, %c0_27, %c0_28] : memref<1x8x16xf32, #tpu.memory_space<vmem>>, vector<1x8x16xf32>
    %56 = vector.shape_cast %55 : vector<1x8x16xf32> to vector<8x16xf32>
    %57 = vector.shape_cast %54 : vector<8x16xf32> to vector<1x8x16xf32>
    tpu.vector_store %arg8[%c0_26, %c0_27, %c0_28], %57 {strides = array<i32>} : memref<1x8x16xf32, #tpu.memory_space<vmem>>, vector<1x8x16xf32>,
    return
  }
  func.func @transform_0(%arg0: i32, %arg1: i32) -> (i32, i32, i32) {
    %c0_i32 = arith.constant 0 : i32
    %c0_i32_0 = arith.constant 0 : i32
    return %arg0, %arg1, %c0_i32 : i32, i32, i32
  }
  func.func @transform_1(%arg0: i32, %arg1: i32) -> (i32, i32, i32, i32) {
    %c0_i32 = arith.constant 0 : i32
    %c0_i32_0 = arith.constant 0 : i32
    %c0_i32_1 = arith.constant 0 : i32
    return %arg0, %arg1, %c0_i32, %c0_i32_0 : i32, i32, i32, i32
  }
  func.func @transform_2(%arg0: i32, %arg1: i32) -> (i32, i32, i32) {
    %c0_i32 = arith.constant 0 : i32
    %c0_i32_0 = arith.constant 0 : i32
    return %arg0, %arg1, %c0_i32 : i32, i32, i32
  }
  func.func @transform_3(%arg0: i32, %arg1: i32) -> (i32, i32, i32) {
    %c0_i32 = arith.constant 0 : i32
    %c0_i32_0 = arith.constant 0 : i32
    return %arg0, %arg1, %c0_i32 : i32, i32, i32
  }
  func.func @transform_4(%arg0: i32, %arg1: i32) -> (i32, i32, i32) {
    %c0_i32 = arith.constant 0 : i32
    %c0_i32_0 = arith.constant 0 : i32
    return %arg0, %arg1, %c0_i32 : i32, i32, i32
  }
  func.func @transform_5(%arg0: i32, %arg1: i32) -> (i32, i32, i32) {
    %c0_i32 = arith.constant 0 : i32
    %c0_i32_0 = arith.constant 0 : i32
    return %arg0, %arg1, %c0_i32 : i32, i32, i32
  }
  func.func @transform_6(%arg0: i32, %arg1: i32) -> (i32, i32, i32) {
    %c0_i32 = arith.constant 0 : i32
    %c0_i32_0 = arith.constant 0 : i32
    return %arg0, %arg1, %c0_i32 : i32, i32, i32
  }
}

</mosaic_0001>

<llo_original>
// kernel: tpu_custom_call.1
$region0: #{tpu_custom_call.1}
  #allocation0 [shape = 'u32[]', space=smem, size = 0x4, offset = 0x4, fixed_abs, tag = 'smem constant byte address 0x4 - core index']
  #allocation1 [shape = 'u32[144,128]{1,0:T(1,128)}', space=vmem, size = 0x12000, scoped, tag = 'internal scratch']
  %s0 = inlined_call_operand.hbm [shape: f32[2,8,8], index: 0, kind: input, shape index: {}]
  %s1 = inlined_call_operand.hbm [shape: f32[2,8,16,16], index: 1, kind: input, shape index: {}]
  %s2 = inlined_call_operand.hbm [shape: f32[2,8,8], index: 2, kind: output, shape index: {0}]
  %s3 = inlined_call_operand.hbm [shape: f32[2,8,16], index: 3, kind: output, shape index: {1}]
  %s4 = inlined_call_operand.hbm [shape: f32[2,8,16], index: 4, kind: output, shape index: {2}]
  %s5 = inlined_call_operand.hbm [shape: f32[2,8,16], index: 5, kind: output, shape index: {3}]
  %s6 = inlined_call_operand.hbm [shape: f32[2,8,16], index: 6, kind: output, shape index: {4}]
  %7 = xla_tuple %s2, %s3, %s4, %s5, %s6
  %s8 = sld [smem:[#allocation0]]
  $region81: #{tpu_custom_call.1} parent=0
    _
  %s10 = ssub.s32 1, %s8
  %s11 = scalar_select 0, %s10, %s8
  $region1: #{tpu_custom_call.1} parent=0
    #allocation2 [shape = 'u8[8192]{0}', space=vmem, size = 0x2000, scoped, tag = 'input window, operand 0']
    #allocation3 [shape = 's32[2]{0}', space=sflag, size = 0x8, scoped, tag = 'scoped memory for tpu_custom_call.1']
    #allocation4 [shape = 's32[2]{0}', space=sflag, size = 0x8, scoped, tag = 'scoped memory for tpu_custom_call.1']
    #allocation5 [shape = 'u8[131072]{0}', space=vmem, size = 0x20000, scoped, tag = 'input window, operand 1']
    #allocation6 [shape = 's32[2]{0}', space=sflag, size = 0x8, scoped, tag = 'scoped memory for tpu_custom_call.1']
    #allocation7 [shape = 'u8[8192]{0}', space=vmem, size = 0x2000, scoped, tag = 'output window, operand 0']
    #allocation8 [shape = 'u8[8192]{0}', space=vmem, size = 0x2000, scoped, tag = 'output window, operand 1']
    #allocation9 [shape = 's32[2]{0}', space=sflag, size = 0x8, scoped, tag = 'scoped memory for tpu_custom_call.1']
    #allocation10 [shape = 'u8[8192]{0}', space=vmem, size = 0x2000, scoped, tag = 'output window, operand 2']
    #allocation11 [shape = 'u8[8192]{0}', space=vmem, size = 0x2000, scoped, tag = 'output window, operand 3']
    #allocation12 [shape = 's32[2]{0}', space=sflag, size = 0x8, scoped, tag = 'scoped memory for tpu_custom_call.1']
    #allocation13 [shape = 'u8[8192]{0}', space=vmem, size = 0x2000, scoped, tag = 'output window, operand 4']
    %12 = vsyncpa [#allocation3], 0
    %s13 = scalar_lea.sflag [#allocation3], 1
    %14 = vsyncpa %s13, 0
    %15 = vsyncpa [#allocation6], 0
    %s16 = scalar_lea.sflag [#allocation6], 1
    %17 = vsyncpa %s16, 0
    %18 = vsyncpa [#allocation4], 0
    %s19 = scalar_lea.sflag [#allocation4], 1
    %20 = vsyncpa %s19, 0
    %21 = vsyncpa [#allocation9], 0
    %s22 = scalar_lea.sflag [#allocation9], 1
    %23 = vsyncpa %s22, 0
    %24 = vsyncpa [#allocation12], 0
    %s25 = scalar_lea.sflag [#allocation12], 1
    %26 = vsyncpa %s25, 0
    loop: start=0, step=1, limit=4
    $region2: #{tpu_custom_call.1} parent=1 // loop_pre_header
      _
    $region3: #{tpu_custom_call.1} parent=1 // loop_header
      %s28 = sphi 0, %s32
      %p29 = scmp.ge.s32.totalorder %s28, 4
      %s35 = sphi 0, %s47
      %s36 = sphi 0, %s43
      %s37 = sphi 0, %s35
      %s38 = sphi 0, %s36
      %s39 = sphi 0, %s37
      %s40 = sphi 0, %s38
      %s52 = sphi 0, %s54
      %s55 = sphi 0, %s52
      %s56 = sphi 0, %s55
      %s72 = sphi 0, %s56
      %s80 = sphi 0, %s82
      %s83 = sphi 0, %s80
      %s84 = sphi 0, %s83
      %s100 = sphi 0, %s84
      %s108 = sphi 0, %s110
      %s111 = sphi 0, %s108
      %s112 = sphi 0, %s111
      %s128 = sphi 0, %s112
      %s136 = sphi 0, %s138
      %s139 = sphi 0, %s136
      %s140 = sphi 0, %s139
      %s156 = sphi 0, %s140
      %s164 = sphi 0, %s166
      %s167 = sphi 0, %s164
      %s168 = sphi 0, %s167
      %s184 = sphi 0, %s168
      %s192 = sphi 0, %s194
      %s195 = sphi 0, %s192
      %s196 = sphi 0, %s195
      %s212 = sphi 0, %s196
      %s220 = sphi 0, %s222
      %s223 = sphi 0, %s220
      %s224 = sphi 0, %s223
      %s240 = sphi 0, %s224
    $region4: #{tpu_custom_call.1} parent=1 // loop_header_branch
      %31 = sbr.rel (%p29) target = $region8
    $region5: #{tpu_custom_call.1} parent=1 // loop_body
      %s33 = ssub.s32 %s28, 1
      %s34 = ssub.s32 %s28, 2
      %s41 = sadd.s32 1, %s36
      %p42 = scmp.ge.s32.totalorder %s41, 1
      %s43 = scalar_select %p42, 0, %s41
      %s44 = sadd.s32 1, %s35
      %s45 = scalar_select %p42, %s44, %s35
      %p46 = scmp.ge.s32.totalorder %s45, 2
      %s47 = scalar_select %p46, 0, %s45
      %s48 = ssub.s32 %s35, %s47
      %s49 = ssub.s32 %s36, %s43
      %s50 = sor.u32 %s48, %s49
      %p51 = scmp.eq.s32.totalorder %s50, 0
      %s53 = sadd.s32 %s52, 1
      %s54 = scalar_select %p51, %s52, %s53
      %p57 = pneg %p51
      %p58 = scmp.eq.s32.totalorder %s28, 1
      %p59 = por %p57, %p58
      %p60 = scmp.ne.s32.totalorder %s52, %s55
      %p61 = scmp.eq.s32.totalorder %s28, 0
      %p62 = por %p60, %p61
      %p63 = scmp.ne.s32.totalorder %s52, %s55
      %p64 = scmp.eq.s32.totalorder %s33, 1
      %p65 = por %p63, %p64
      %p66 = scmp.ne.s32.totalorder %s55, %s56
      %p67 = scmp.eq.s32.totalorder %s33, 0
      %p68 = por %p66, %p67
      %p69 = scmp.ne.s32.totalorder %s55, %s56
      %p70 = scmp.eq.s32.totalorder %s34, 1
      %p71 = por %p69, %p70
      %p73 = scmp.ne.s32.totalorder %s56, %s72
      %p74 = scmp.eq.s32.totalorder %s34, 0
      %p75 = por %p73, %p74
      %s76 = ssub.s32 %s35, %s47
      %s77 = ssub.s32 %s36, %s43
      %s78 = sor.u32 %s76, %s77
      %p79 = scmp.eq.s32.totalorder %s78, 0
      %s81 = sadd.s32 %s80, 1
      %s82 = scalar_select %p79, %s80, %s81
      %p85 = pneg %p79
      %p86 = scmp.eq.s32.totalorder %s28, 1
      %p87 = por %p85, %p86
      %p88 = scmp.ne.s32.totalorder %s80, %s83
      %p89 = scmp.eq.s32.totalorder %s28, 0
      %p90 = por %p88, %p89
      %p91 = scmp.ne.s32.totalorder %s80, %s83
      %p92 = scmp.eq.s32.totalorder %s33, 1
      %p93 = por %p91, %p92
      %p94 = scmp.ne.s32.totalorder %s83, %s84
      %p95 = scmp.eq.s32.totalorder %s33, 0
      %p96 = por %p94, %p95
      %p97 = scmp.ne.s32.totalorder %s83, %s84
      %p98 = scmp.eq.s32.totalorder %s34, 1
      %p99 = por %p97, %p98
      %p101 = scmp.ne.s32.totalorder %s84, %s100
      %p102 = scmp.eq.s32.totalorder %s34, 0
      %p103 = por %p101, %p102
      %s104 = ssub.s32 %s35, %s47
      %s105 = ssub.s32 %s36, %s43
      %s106 = sor.u32 %s104, %s105
      %p107 = scmp.eq.s32.totalorder %s106, 0
      %s109 = sadd.s32 %s108, 1
      %s110 = scalar_select %p107, %s108, %s109
      %p113 = pneg %p107
      %p114 = scmp.eq.s32.totalorder %s28, 1
      %p115 = por %p113, %p114
      %p116 = scmp.ne.s32.totalorder %s108, %s111
      %p117 = scmp.eq.s32.totalorder %s28, 0
      %p118 = por %p116, %p117
      %p119 = scmp.ne.s32.totalorder %s108, %s111
      %p120 = scmp.eq.s32.totalorder %s33, 1
      %p121 = por %p119, %p120
      %p122 = scmp.ne.s32.totalorder %s111, %s112
      %p123 = scmp.eq.s32.totalorder %s33, 0
      %p124 = por %p122, %p123
      %p125 = scmp.ne.s32.totalorder %s111, %s112
      %p126 = scmp.eq.s32.totalorder %s34, 1
      %p127 = por %p125, %p126
      %p129 = scmp.ne.s32.totalorder %s112, %s128
      %p130 = scmp.eq.s32.totalorder %s34, 0
      %p131 = por %p129, %p130
      %s132 = ssub.s32 %s35, %s47
      %s133 = ssub.s32 %s36, %s43
      %s134 = sor.u32 %s132, %s133
      %p135 = scmp.eq.s32.totalorder %s134, 0
      %s137 = sadd.s32 %s136, 1
      %s138 = scalar_select %p135, %s136, %s137
      %p141 = pneg %p135
      %p142 = scmp.eq.s32.totalorder %s28, 1
      %p143 = por %p141, %p142
      %p144 = scmp.ne.s32.totalorder %s136, %s139
      %p145 = scmp.eq.s32.totalorder %s28, 0
      %p146 = por %p144, %p145
      %p147 = scmp.ne.s32.totalorder %s136, %s139
      %p148 = scmp.eq.s32.totalorder %s33, 1
      %p149 = por %p147, %p148
      %p150 = scmp.ne.s32.totalorder %s139, %s140
      %p151 = scmp.eq.s32.totalorder %s33, 0
      %p152 = por %p150, %p151
      %p153 = scmp.ne.s32.totalorder %s139, %s140
      %p154 = scmp.eq.s32.totalorder %s34, 1
      %p155 = por %p153, %p154
      %p157 = scmp.ne.s32.totalorder %s140, %s156
      %p158 = scmp.eq.s32.totalorder %s34, 0
      %p159 = por %p157, %p158
      %s160 = ssub.s32 %s35, %s47
      %s161 = ssub.s32 %s36, %s43
      %s162 = sor.u32 %s160, %s161
      %p163 = scmp.eq.s32.totalorder %s162, 0
      %s165 = sadd.s32 %s164, 1
      %s166 = scalar_select %p163, %s164, %s165
      %p169 = pneg %p163
      %p170 = scmp.eq.s32.totalorder %s28, 1
      %p171 = por %p169, %p170
      %p172 = scmp.ne.s32.totalorder %s164, %s167
      %p173 = scmp.eq.s32.totalorder %s28, 0
      %p174 = por %p172, %p173
      %p175 = scmp.ne.s32.totalorder %s164, %s167
      %p176 = scmp.eq.s32.totalorder %s33, 1
      %p177 = por %p175, %p176
      %p178 = scmp.ne.s32.totalorder %s167, %s168
      %p179 = scmp.eq.s32.totalorder %s33, 0
      %p180 = por %p178, %p179
      %p181 = scmp.ne.s32.totalorder %s167, %s168
      %p182 = scmp.eq.s32.totalorder %s34, 1
      %p183 = por %p181, %p182
      %p185 = scmp.ne.s32.totalorder %s168, %s184
      %p186 = scmp.eq.s32.totalorder %s34, 0
      %p187 = por %p185, %p186
      %s188 = ssub.s32 %s35, %s47
      %s189 = ssub.s32 %s36, %s43
      %s190 = sor.u32 %s188, %s189
      %p191 = scmp.eq.s32.totalorder %s190, 0
      %s193 = sadd.s32 %s192, 1
      %s194 = scalar_select %p191, %s192, %s193
      %p197 = pneg %p191
      %p198 = scmp.eq.s32.totalorder %s28, 1
      %p199 = por %p197, %p198
      %p200 = scmp.ne.s32.totalorder %s192, %s195
      %p201 = scmp.eq.s32.totalorder %s28, 0
      %p202 = por %p200, %p201
      %p203 = scmp.ne.s32.totalorder %s192, %s195
      %p204 = scmp.eq.s32.totalorder %s33, 1
      %p205 = por %p203, %p204
      %p206 = scmp.ne.s32.totalorder %s195, %s196
      %p207 = scmp.eq.s32.totalorder %s33, 0
      %p208 = por %p206, %p207
      %p209 = scmp.ne.s32.totalorder %s195, %s196
      %p210 = scmp.eq.s32.totalorder %s34, 1
      %p211 = por %p209, %p210
      %p213 = scmp.ne.s32.totalorder %s196, %s212
      %p214 = scmp.eq.s32.totalorder %s34, 0
      %p215 = por %p213, %p214
      %s216 = ssub.s32 %s35, %s47
      %s217 = ssub.s32 %s36, %s43
      %s218 = sor.u32 %s216, %s217
      %p219 = scmp.eq.s32.totalorder %s218, 0
      %s221 = sadd.s32 %s220, 1
      %s222 = scalar_select %p219, %s220, %s221
      %p225 = pneg %p219
      %p226 = scmp.eq.s32.totalorder %s28, 1
      %p227 = por %p225, %p226
      %p228 = scmp.ne.s32.totalorder %s220, %s223
      %p229 = scmp.eq.s32.totalorder %s28, 0
      %p230 = por %p228, %p229
      %p231 = scmp.ne.s32.totalorder %s220, %s223
      %p232 = scmp.eq.s32.totalorder %s33, 1
      %p233 = por %p231, %p232
      %p234 = scmp.ne.s32.totalorder %s223, %s224
      %p235 = scmp.eq.s32.totalorder %s33, 0
      %p236 = por %p234, %p235
      %p237 = scmp.ne.s32.totalorder %s223, %s224
      %p238 = scmp.eq.s32.totalorder %s34, 1
      %p239 = por %p237, %p238
      %p241 = scmp.ne.s32.totalorder %s224, %s240
      %p242 = scmp.eq.s32.totalorder %s34, 0
      %p243 = por %p241, %p242
      %p244 = scmp.le.s32.totalorder 1, %s28
      %p245 = scmp.lt.s32.totalorder %s28, 3
      %p246 = pnand %p244, %p245
      %p247 = pneg %p246
      // Predicated region
      $region9: #{tpu_custom_call.1} parent=5 // pred_check
        _
      $region10: #{tpu_custom_call.1} parent=5 // pred_check_branch
        %249 = sbr.rel (%p246) target = $region12
      $region11: #{tpu_custom_call.1} parent=5 // pred_region
        %s250 = ssub.s32 %s28, 1
      $region12: #{tpu_custom_call.1} parent=5 // pred_fallthru
        _
      %p251 = scmp.lt.s32.totalorder %s28, 2
      // Predicated region
      $region13: #{tpu_custom_call.1} parent=5 // pred_check
        %p252 = pneg %p251
      $region14: #{tpu_custom_call.1} parent=5 // pred_check_branch
        %254 = sbr.rel (%p252) target = $region16
      $region15: #{tpu_custom_call.1} parent=5 // pred_region
        // Predicated region
        $region17: #{tpu_custom_call.1} parent=15 // pred_check
          %p255 = pneg %p62
        $region18: #{tpu_custom_call.1} parent=15 // pred_check_branch
          %257 = sbr.rel (%p255) target = $region20
        $region19: #{tpu_custom_call.1} parent=15 // pred_region
          %s258 = sand.u32 %s52, 1
          %s259 = scalar_lea.sflag [#allocation3], %s258
          %s260 = sand.u32 %s52, 1
          %s261 = smul.addr %s260, 8
          %s262 = scalar_lea.vmem [#allocation2], %s261
          %s264 = ssub.s32 128, 128
          %265 = vsyncadd %s259, %s264
          %s266 = sadd.s32 %s36, %s35
          %s267 = smul.addr %s266, 128
          %s268 = scalar_lea.hbm %s0, %s267
          %s270 = sshll.u32 %s262, 4
          %s271 = int_to_ptr.vmem [resolvable:$true] %s270
          %273 = dma.hbm_to_vmem [thread:$0]  %s268, 128, %s271, %s259
        $region20: #{tpu_custom_call.1} parent=15 // pred_fallthru
          _
        // Predicated region
        $region21: #{tpu_custom_call.1} parent=15 // pred_check
          %p274 = pneg %p90
        $region22: #{tpu_custom_call.1} parent=15 // pred_check_branch
          %276 = sbr.rel (%p274) target = $region24
        $region23: #{tpu_custom_call.1} parent=15 // pred_region
          %s277 = sand.u32 %s80, 1
          %s278 = scalar_lea.sflag [#allocation6], %s277
          %s279 = sand.u32 %s80, 1
          %s280 = smul.addr %s279, 128
          %s281 = scalar_lea.vmem [#allocation5], %s280
          %s282 = smul.u32 8, %s36
          %s284 = ssub.s32 2048, 2048
          %285 = vsyncadd %s278, %s284
          %s286 = smul.addr %s282, 2
          %s287 = smul.addr %s35, 16
          %s288 = sadd.s32 %s286, %s287
          %s289 = smul.addr %s288, 128
          %s290 = scalar_lea.hbm %s1, %s289
          %s291 = sshll.u32 %s281, 4
          %s292 = int_to_ptr.vmem [resolvable:$true] %s291
          %297 = dma.hbm_to_vmem [thread:$0]  %s290, 2048, %s292, %s278, 128, 128, 8
        $region24: #{tpu_custom_call.1} parent=15 // pred_fallthru
          _
      $region16: #{tpu_custom_call.1} parent=5 // pred_fallthru
        _
      %p298 = scmp.le.s32.totalorder 1, %s28
      %p299 = scmp.lt.s32.totalorder %s28, 3
      %p300 = pnand %p298, %p299
      %p301 = pneg %p300
      // Predicated region
      $region25: #{tpu_custom_call.1} parent=5 // pred_check
        _
      $region26: #{tpu_custom_call.1} parent=5 // pred_check_branch
        %303 = sbr.rel (%p300) target = $region28
      $region27: #{tpu_custom_call.1} parent=5 // pred_region
        %s304 = ssub.s32 %s28, 1
        %s305 = sand.u32 %s55, 1
        %s306 = scalar_lea.sflag [#allocation3], %s305
        %s307 = sand.u32 %s55, 1
        %s308 = smul.addr %s307, 8
        %s309 = scalar_lea.vmem [#allocation2], %s308
        // Predicated region
        $region29: #{tpu_custom_call.1} parent=27 // pred_check
          %p310 = pneg %p68
        $region30: #{tpu_custom_call.1} parent=27 // pred_check_branch
          %312 = sbr.rel (%p310) target = $region32
        $region31: #{tpu_custom_call.1} parent=27 // pred_region
          %313 = dma.done %s306, 128
        $region32: #{tpu_custom_call.1} parent=27 // pred_fallthru
          _
        %s314 = sand.u32 %s83, 1
        %s315 = scalar_lea.sflag [#allocation6], %s314
        %s316 = sand.u32 %s83, 1
        %s317 = smul.addr %s316, 128
        %s318 = scalar_lea.vmem [#allocation5], %s317
        // Predicated region
        $region33: #{tpu_custom_call.1} parent=27 // pred_check
          %p319 = pneg %p96
        $region34: #{tpu_custom_call.1} parent=27 // pred_check_branch
          %321 = sbr.rel (%p319) target = $region36
        $region35: #{tpu_custom_call.1} parent=27 // pred_region
          %322 = dma.done %s315, 2048
        $region36: #{tpu_custom_call.1} parent=27 // pred_fallthru
          _
        %s323 = sand.u32 %s55, 1
        %s324 = scalar_lea.sflag [#allocation3], %s323
        %s325 = sand.u32 %s55, 1
        %s326 = smul.addr %s325, 8
        %s327 = scalar_lea.vmem [#allocation2], %s326
        %p328 = pneg %p68
        %p329 = pneg %p65
        %s330 = sand.u32 %s83, 1
        %s331 = scalar_lea.sflag [#allocation6], %s330
        %s332 = sand.u32 %s83, 1
        %s333 = smul.addr %s332, 128
        %s334 = scalar_lea.vmem [#allocation5], %s333
        %p335 = pneg %p96
        %p336 = pneg %p93
        %p337 = pneg %p124
        %p338 = pneg %p121
        %s339 = sand.u32 %s111, 1
        %s340 = scalar_lea.sflag [#allocation4], %s339
        %s341 = sand.u32 %s111, 1
        %s342 = smul.addr %s341, 8
        %s343 = scalar_lea.vmem [#allocation7], %s342
        %p344 = pneg %p152
        %p345 = pneg %p149
        %s346 = sand.u32 %s33, 1
        %s347 = scalar_lea.sflag [#allocation9], %s346
        %s348 = sand.u32 %s139, 1
        %s349 = smul.addr %s348, 8
        %s350 = scalar_lea.vmem [#allocation8], %s349
        %p351 = pneg %p180
        %p352 = pneg %p177
        %s353 = sand.u32 %s33, 1
        %s354 = scalar_lea.sflag [#allocation9], %s353
        %s355 = sand.u32 %s167, 1
        %s356 = smul.addr %s355, 8
        %s357 = scalar_lea.vmem [#allocation10], %s356
        %p358 = pneg %p208
        %p359 = pneg %p205
        %s360 = sand.u32 %s33, 1
        %s361 = scalar_lea.sflag [#allocation12], %s360
        %s362 = sand.u32 %s195, 1
        %s363 = smul.addr %s362, 8
        %s364 = scalar_lea.vmem [#allocation11], %s363
        %p365 = pneg %p236
        %p366 = pneg %p233
        %s367 = sand.u32 %s33, 1
        %s368 = scalar_lea.sflag [#allocation12], %s367
        %s369 = sand.u32 %s223, 1
        %s370 = smul.addr %s369, 8
        %s371 = scalar_lea.vmem [#allocation13], %s370
        %s372 = smul.u32 8, %s38
        %v373 = vld [vmem:[%s309] sm:$0xff]
        %vm374 = vcmask 64512
        %v375 = vsel %vm374, %v373, -inf
        %376 = vmax.xlane.f32.xlu0 %v375
        %v377 = vpop.xlane.xlu0 %376
        %v378 = vsub.f32 %v373, %v377
        %v379 = vmul.f32 %v378, 1.442695
        %v380 = vpow.pop %v379
        %v381 = vsel %vm374, %v380, 0.0
        %382 = vadd.xlane.f32.xlu0 %v381
        %v383 = vpop.xlane.xlu0 %382
        %v384 = vrcp.pop %v383
        %v385 = vmul.f32 %v380, %v384
        %386 = vst.msk [vmem:[%s343] sm:$0xff] %vm374, %v385
        %v387 = vld [vmem:[%s318] sm:$0xff]
        %v388 = vld [vmem:[%s318 + $0x8] sm:$0xff]
        %v389 = vld [vmem:[%s318 + $0x10] sm:$0xff]
        %v390 = vld [vmem:[%s318 + $0x18] sm:$0xff]
        %v391 = vld [vmem:[%s318 + $0x20] sm:$0xff]
        %v392 = vld [vmem:[%s318 + $0x28] sm:$0xff]
        %v393 = vld [vmem:[%s318 + $0x30] sm:$0xff]
        %v394 = vld [vmem:[%s318 + $0x38] sm:$0xff]
        %v395 = vld [vmem:[%s318 + $0x40] sm:$0xff]
        %v396 = vld [vmem:[%s318 + $0x48] sm:$0xff]
        %v397 = vld [vmem:[%s318 + $0x50] sm:$0xff]
        %v398 = vld [vmem:[%s318 + $0x58] sm:$0xff]
        %v399 = vld [vmem:[%s318 + $0x60] sm:$0xff]
        %v400 = vld [vmem:[%s318 + $0x68] sm:$0xff]
        %v401 = vld [vmem:[%s318 + $0x70] sm:$0xff]
        %v402 = vld [vmem:[%s318 + $0x78] sm:$0xff]
        %vm403 = vcmask 130048
        %v404 = vsel %vm403, %v387, -inf
        %405 = vmax.xlane.f32.xlu0 %v404
        %v406 = vpop.xlane.xlu0 %405
        %v407 = vsel %vm403, %v388, -inf
        %408 = vmax.xlane.f32.xlu0 %v407
        %v409 = vpop.xlane.xlu0 %408
        %v410 = vsel %vm403, %v389, -inf
        %411 = vmax.xlane.f32.xlu0 %v410
        %v412 = vpop.xlane.xlu0 %411
        %v413 = vsel %vm403, %v390, -inf
        %414 = vmax.xlane.f32.xlu0 %v413
        %v415 = vpop.xlane.xlu0 %414
        %v416 = vsel %vm403, %v391, -inf
        %417 = vmax.xlane.f32.xlu0 %v416
        %v418 = vpop.xlane.xlu0 %417
        %v419 = vsel %vm403, %v392, -inf
        %420 = vmax.xlane.f32.xlu0 %v419
        %v421 = vpop.xlane.xlu0 %420
        %v422 = vsel %vm403, %v393, -inf
        %423 = vmax.xlane.f32.xlu0 %v422
        %v424 = vpop.xlane.xlu0 %423
        %v425 = vsel %vm403, %v394, -inf
        %426 = vmax.xlane.f32.xlu0 %v425
        %v427 = vpop.xlane.xlu0 %426
        %v428 = vsel %vm403, %v395, -inf
        %429 = vmax.xlane.f32.xlu0 %v428
        %v430 = vpop.xlane.xlu0 %429
        %v431 = vsel %vm403, %v396, -inf
        %432 = vmax.xlane.f32.xlu0 %v431
        %v433 = vpop.xlane.xlu0 %432
        %v434 = vsel %vm403, %v397, -inf
        %435 = vmax.xlane.f32.xlu0 %v434
        %v436 = vpop.xlane.xlu0 %435
        %v437 = vsel %vm403, %v398, -inf
        %438 = vmax.xlane.f32.xlu0 %v437
        %v439 = vpop.xlane.xlu0 %438
        %v440 = vsel %vm403, %v399, -inf
        %441 = vmax.xlane.f32.xlu0 %v440
        %v442 = vpop.xlane.xlu0 %441
        %v443 = vsel %vm403, %v400, -inf
        %444 = vmax.xlane.f32.xlu0 %v443
        %v445 = vpop.xlane.xlu0 %444
        %v446 = vsel %vm403, %v401, -inf
        %447 = vmax.xlane.f32.xlu0 %v446
        %v448 = vpop.xlane.xlu0 %447
        %v449 = vsel %vm403, %v402, -inf
        %450 = vmax.xlane.f32.xlu0 %v449
        %v451 = vpop.xlane.xlu0 %450
        %v452 = vlaneseq
        %v453 = vand.u32 %v452, 127
        %vm454 = vcmp.eq.f32.partialorder %v387, %v406
        %vm455 = vcmp.eq.f32.partialorder %v388, %v409
        %vm456 = vcmp.eq.f32.partialorder %v389, %v412
        %vm457 = vcmp.eq.f32.partialorder %v390, %v415
        %vm458 = vcmp.eq.f32.partialorder %v391, %v418
        %vm459 = vcmp.eq.f32.partialorder %v392, %v421
        %vm460 = vcmp.eq.f32.partialorder %v393, %v424
        %vm461 = vcmp.eq.f32.partialorder %v394, %v427
        %vm462 = vcmp.eq.f32.partialorder %v395, %v430
        %vm463 = vcmp.eq.f32.partialorder %v396, %v433
        %vm464 = vcmp.eq.f32.partialorder %v397, %v436
        %vm465 = vcmp.eq.f32.partialorder %v398, %v439
        %vm466 = vcmp.eq.f32.partialorder %v399, %v442
        %vm467 = vcmp.eq.f32.partialorder %v400, %v445
        %vm468 = vcmp.eq.f32.partialorder %v401, %v448
        %vm469 = vcmp.eq.f32.partialorder %v402, %v451
        %v470 = vsel %vm454, %v453, 1073741824
        %v471 = vsel %vm455, %v453, 1073741824
        %v472 = vsel %vm456, %v453, 1073741824
        %v473 = vsel %vm457, %v453, 1073741824
        %v474 = vsel %vm458, %v453, 1073741824
        %v475 = vsel %vm459, %v453, 1073741824
        %v476 = vsel %vm460, %v453, 1073741824
        %v477 = vsel %vm461, %v453, 1073741824
        %v478 = vsel %vm462, %v453, 1073741824
        %v479 = vsel %vm463, %v453, 1073741824
        %v480 = vsel %vm464, %v453, 1073741824
        %v481 = vsel %vm465, %v453, 1073741824
        %v482 = vsel %vm466, %v453, 1073741824
        %v483 = vsel %vm467, %v453, 1073741824
        %v484 = vsel %vm468, %v453, 1073741824
        %v485 = vsel %vm469, %v453, 1073741824
        %v486 = vsel %vm403, %v470, 2147483647
        %v487 = vand.u32 %v486, 65535
        %v488 = vshra.s32 %v486, 16
        %v489 = vcvt.s32.f32 %v487
        %v490 = vcvt.s32.f32 %v488
        %491 = vmin.xlane.f32.xlu0 %v490
        %v492 = vpop.xlane.xlu0 %491
        %vm493 = vcmp.eq.f32.partialorder %v490, %v492
        %v494 = vsel %vm493, %v489, inf
        %495 = vmin.xlane.f32.xlu0 %v494
        %v496 = vpop.xlane.xlu0 %495
        %v497 = vcvt.f32.s32 %v496
        %v498 = vcvt.f32.s32 %v492
        %v499 = vshll.u32 %v498, 16
        %v500 = vadd.s32 %v499, %v497
        %v501 = vsel %vm403, %v471, 2147483647
        %v502 = vand.u32 %v501, 65535
        %v503 = vshra.s32 %v501, 16
        %v504 = vcvt.s32.f32 %v502
        %v505 = vcvt.s32.f32 %v503
        %506 = vmin.xlane.f32.xlu0 %v505
        %v507 = vpop.xlane.xlu0 %506
        %vm508 = vcmp.eq.f32.partialorder %v505, %v507
        %v509 = vsel %vm508, %v504, inf
        %510 = vmin.xlane.f32.xlu0 %v509
        %v511 = vpop.xlane.xlu0 %510
        %v512 = vcvt.f32.s32 %v511
        %v513 = vcvt.f32.s32 %v507
        %v514 = vshll.u32 %v513, 16
        %v515 = vadd.s32 %v514, %v512
        %v516 = vsel %vm403, %v472, 2147483647
        %v517 = vand.u32 %v516, 65535
        %v518 = vshra.s32 %v516, 16
        %v519 = vcvt.s32.f32 %v517
        %v520 = vcvt.s32.f32 %v518
        %521 = vmin.xlane.f32.xlu0 %v520
        %v522 = vpop.xlane.xlu0 %521
        %vm523 = vcmp.eq.f32.partialorder %v520, %v522
        %v524 = vsel %vm523, %v519, inf
        %525 = vmin.xlane.f32.xlu0 %v524
        %v526 = vpop.xlane.xlu0 %525
        %v527 = vcvt.f32.s32 %v526
        %v528 = vcvt.f32.s32 %v522
        %v529 = vshll.u32 %v528, 16
        %v530 = vadd.s32 %v529, %v527
        %v531 = vsel %vm403, %v473, 2147483647
        %v532 = vand.u32 %v531, 65535
        %v533 = vshra.s32 %v531, 16
        %v534 = vcvt.s32.f32 %v532
        %v535 = vcvt.s32.f32 %v533
        %536 = vmin.xlane.f32.xlu0 %v535
        %v537 = vpop.xlane.xlu0 %536
        %vm538 = vcmp.eq.f32.partialorder %v535, %v537
        %v539 = vsel %vm538, %v534, inf
        %540 = vmin.xlane.f32.xlu0 %v539
        %v541 = vpop.xlane.xlu0 %540
        %v542 = vcvt.f32.s32 %v541
        %v543 = vcvt.f32.s32 %v537
        %v544 = vshll.u32 %v543, 16
        %v545 = vadd.s32 %v544, %v542
        %v546 = vsel %vm403, %v474, 2147483647
        %v547 = vand.u32 %v546, 65535
        %v548 = vshra.s32 %v546, 16
        %v549 = vcvt.s32.f32 %v547
        %v550 = vcvt.s32.f32 %v548
        %551 = vmin.xlane.f32.xlu0 %v550
        %v552 = vpop.xlane.xlu0 %551
        %vm553 = vcmp.eq.f32.partialorder %v550, %v552
        %v554 = vsel %vm553, %v549, inf
        %555 = vmin.xlane.f32.xlu0 %v554
        %v556 = vpop.xlane.xlu0 %555
        %v557 = vcvt.f32.s32 %v556
        %v558 = vcvt.f32.s32 %v552
        %v559 = vshll.u32 %v558, 16
        %v560 = vadd.s32 %v559, %v557
        %v561 = vsel %vm403, %v475, 2147483647
        %v562 = vand.u32 %v561, 65535
        %v563 = vshra.s32 %v561, 16
        %v564 = vcvt.s32.f32 %v562
        %v565 = vcvt.s32.f32 %v563
        %566 = vmin.xlane.f32.xlu0 %v565
        %v567 = vpop.xlane.xlu0 %566
        %vm568 = vcmp.eq.f32.partialorder %v565, %v567
        %v569 = vsel %vm568, %v564, inf
        %570 = vmin.xlane.f32.xlu0 %v569
        %v571 = vpop.xlane.xlu0 %570
        %v572 = vcvt.f32.s32 %v571
        %v573 = vcvt.f32.s32 %v567
        %v574 = vshll.u32 %v573, 16
        %v575 = vadd.s32 %v574, %v572
        %v576 = vsel %vm403, %v476, 2147483647
        %v577 = vand.u32 %v576, 65535
        %v578 = vshra.s32 %v576, 16
        %v579 = vcvt.s32.f32 %v577
        %v580 = vcvt.s32.f32 %v578
        %581 = vmin.xlane.f32.xlu0 %v580
        %v582 = vpop.xlane.xlu0 %581
        %vm583 = vcmp.eq.f32.partialorder %v580, %v582
        %v584 = vsel %vm583, %v579, inf
        %585 = vmin.xlane.f32.xlu0 %v584
        %v586 = vpop.xlane.xlu0 %585
        %v587 = vcvt.f32.s32 %v586
        %v588 = vcvt.f32.s32 %v582
        %v589 = vshll.u32 %v588, 16
        %v590 = vadd.s32 %v589, %v587
        %v591 = vsel %vm403, %v477, 2147483647
        %v592 = vand.u32 %v591, 65535
        %v593 = vshra.s32 %v591, 16
        %v594 = vcvt.s32.f32 %v592
        %v595 = vcvt.s32.f32 %v593
        %596 = vmin.xlane.f32.xlu0 %v595
        %v597 = vpop.xlane.xlu0 %596
        %vm598 = vcmp.eq.f32.partialorder %v595, %v597
        %v599 = vsel %vm598, %v594, inf
        %600 = vmin.xlane.f32.xlu0 %v599
        %v601 = vpop.xlane.xlu0 %600
        %v602 = vcvt.f32.s32 %v601
        %v603 = vcvt.f32.s32 %v597
        %v604 = vshll.u32 %v603, 16
        %v605 = vadd.s32 %v604, %v602
        %v606 = vsel %vm403, %v478, 2147483647
        %v607 = vand.u32 %v606, 65535
        %v608 = vshra.s32 %v606, 16
        %v609 = vcvt.s32.f32 %v607
        %v610 = vcvt.s32.f32 %v608
        %611 = vmin.xlane.f32.xlu0 %v610
        %v612 = vpop.xlane.xlu0 %611
        %vm613 = vcmp.eq.f32.partialorder %v610, %v612
        %v614 = vsel %vm613, %v609, inf
        %615 = vmin.xlane.f32.xlu0 %v614
        %v616 = vpop.xlane.xlu0 %615
        %v617 = vcvt.f32.s32 %v616
        %v618 = vcvt.f32.s32 %v612
        %v619 = vshll.u32 %v618, 16
        %v620 = vadd.s32 %v619, %v617
        %v621 = vsel %vm403, %v479, 2147483647
        %v622 = vand.u32 %v621, 65535
        %v623 = vshra.s32 %v621, 16
        %v624 = vcvt.s32.f32 %v622
        %v625 = vcvt.s32.f32 %v623
        %626 = vmin.xlane.f32.xlu0 %v625
        %v627 = vpop.xlane.xlu0 %626
        %vm628 = vcmp.eq.f32.partialorder %v625, %v627
        %v629 = vsel %vm628, %v624, inf
        %630 = vmin.xlane.f32.xlu0 %v629
        %v631 = vpop.xlane.xlu0 %630
        %v632 = vcvt.f32.s32 %v631
        %v633 = vcvt.f32.s32 %v627
        %v634 = vshll.u32 %v633, 16
        %v635 = vadd.s32 %v634, %v632
        %v636 = vsel %vm403, %v480, 2147483647
        %v637 = vand.u32 %v636, 65535
        %v638 = vshra.s32 %v636, 16
        %v639 = vcvt.s32.f32 %v637
        %v640 = vcvt.s32.f32 %v638
        %641 = vmin.xlane.f32.xlu0 %v640
        %v642 = vpop.xlane.xlu0 %641
        %vm643 = vcmp.eq.f32.partialorder %v640, %v642
        %v644 = vsel %vm643, %v639, inf
        %645 = vmin.xlane.f32.xlu0 %v644
        %v646 = vpop.xlane.xlu0 %645
        %v647 = vcvt.f32.s32 %v646
        %v648 = vcvt.f32.s32 %v642
        %v649 = vshll.u32 %v648, 16
        %v650 = vadd.s32 %v649, %v647
        %v651 = vsel %vm403, %v481, 2147483647
        %v652 = vand.u32 %v651, 65535
        %v653 = vshra.s32 %v651, 16
        %v654 = vcvt.s32.f32 %v652
        %v655 = vcvt.s32.f32 %v653
        %656 = vmin.xlane.f32.xlu0 %v655
        %v657 = vpop.xlane.xlu0 %656
        %vm658 = vcmp.eq.f32.partialorder %v655, %v657
        %v659 = vsel %vm658, %v654, inf
        %660 = vmin.xlane.f32.xlu0 %v659
        %v661 = vpop.xlane.xlu0 %660
        %v662 = vcvt.f32.s32 %v661
        %v663 = vcvt.f32.s32 %v657
        %v664 = vshll.u32 %v663, 16
        %v665 = vadd.s32 %v664, %v662
        %v666 = vsel %vm403, %v482, 2147483647
        %v667 = vand.u32 %v666, 65535
        %v668 = vshra.s32 %v666, 16
        %v669 = vcvt.s32.f32 %v667
        %v670 = vcvt.s32.f32 %v668
        %671 = vmin.xlane.f32.xlu0 %v670
        %v672 = vpop.xlane.xlu0 %671
        %vm673 = vcmp.eq.f32.partialorder %v670, %v672
        %v674 = vsel %vm673, %v669, inf
        %675 = vmin.xlane.f32.xlu0 %v674
        %v676 = vpop.xlane.xlu0 %675
        %v677 = vcvt.f32.s32 %v676
        %v678 = vcvt.f32.s32 %v672
        %v679 = vshll.u32 %v678, 16
        %v680 = vadd.s32 %v679, %v677
        %v681 = vsel %vm403, %v483, 2147483647
        %v682 = vand.u32 %v681, 65535
        %v683 = vshra.s32 %v681, 16
        %v684 = vcvt.s32.f32 %v682
        %v685 = vcvt.s32.f32 %v683
        %686 = vmin.xlane.f32.xlu0 %v685
        %v687 = vpop.xlane.xlu0 %686
        %vm688 = vcmp.eq.f32.partialorder %v685, %v687
        %v689 = vsel %vm688, %v684, inf
        %690 = vmin.xlane.f32.xlu0 %v689
        %v691 = vpop.xlane.xlu0 %690
        %v692 = vcvt.f32.s32 %v691
        %v693 = vcvt.f32.s32 %v687
        %v694 = vshll.u32 %v693, 16
        %v695 = vadd.s32 %v694, %v692
        %v696 = vsel %vm403, %v484, 2147483647
        %v697 = vand.u32 %v696, 65535
        %v698 = vshra.s32 %v696, 16
        %v699 = vcvt.s32.f32 %v697
        %v700 = vcvt.s32.f32 %v698
        %701 = vmin.xlane.f32.xlu0 %v700
        %v702 = vpop.xlane.xlu0 %701
        %vm703 = vcmp.eq.f32.partialorder %v700, %v702
        %v704 = vsel %vm703, %v699, inf
        %705 = vmin.xlane.f32.xlu0 %v704
        %v706 = vpop.xlane.xlu0 %705
        %v707 = vcvt.f32.s32 %v706
        %v708 = vcvt.f32.s32 %v702
        %v709 = vshll.u32 %v708, 16
        %v710 = vadd.s32 %v709, %v707
        %v711 = vsel %vm403, %v485, 2147483647
        %v712 = vand.u32 %v711, 65535
        %v713 = vshra.s32 %v711, 16
        %v714 = vcvt.s32.f32 %v712
        %v715 = vcvt.s32.f32 %v713
        %716 = vmin.xlane.f32.xlu0 %v715
        %v717 = vpop.xlane.xlu0 %716
        %vm718 = vcmp.eq.f32.partialorder %v715, %v717
        %v719 = vsel %vm718, %v714, inf
        %720 = vmin.xlane.f32.xlu0 %v719
        %v721 = vpop.xlane.xlu0 %720
        %v722 = vcvt.f32.s32 %v721
        %v723 = vcvt.f32.s32 %v717
        %v724 = vshll.u32 %v723, 16
        %v725 = vadd.s32 %v724, %v722
        %v726 = vxor.u32 %v406, 2147483648
        %v727 = vxor.u32 %v409, 2147483648
        %v728 = vxor.u32 %v412, 2147483648
        %v729 = vxor.u32 %v415, 2147483648
        %v730 = vxor.u32 %v418, 2147483648
        %v731 = vxor.u32 %v421, 2147483648
        %v732 = vxor.u32 %v424, 2147483648
        %v733 = vxor.u32 %v427, 2147483648
        %v734 = vxor.u32 %v430, 2147483648
        %v735 = vxor.u32 %v433, 2147483648
        %v736 = vxor.u32 %v436, 2147483648
        %v737 = vxor.u32 %v439, 2147483648
        %v738 = vxor.u32 %v442, 2147483648
        %v739 = vxor.u32 %v445, 2147483648
        %v740 = vxor.u32 %v448, 2147483648
        %v741 = vxor.u32 %v451, 2147483648
        %v742 = vmul.f32 %v726, 1.442695
        %v743 = vpow.pop %v742
        %v744 = vmul.f32 %v727, 1.442695
        %v745 = vpow.pop %v744
        %v746 = vmul.f32 %v728, 1.442695
        %v747 = vpow.pop %v746
        %v748 = vmul.f32 %v729, 1.442695
        %v749 = vpow.pop %v748
        %v750 = vmul.f32 %v730, 1.442695
        %v751 = vpow.pop %v750
        %v752 = vmul.f32 %v731, 1.442695
        %v753 = vpow.pop %v752
        %v754 = vmul.f32 %v732, 1.442695
        %v755 = vpow.pop %v754
        %v756 = vmul.f32 %v733, 1.442695
        %v757 = vpow.pop %v756
        %v758 = vmul.f32 %v734, 1.442695
        %v759 = vpow.pop %v758
        %v760 = vmul.f32 %v735, 1.442695
        %v761 = vpow.pop %v760
        %v762 = vmul.f32 %v736, 1.442695
        %v763 = vpow.pop %v762
        %v764 = vmul.f32 %v737, 1.442695
        %v765 = vpow.pop %v764
        %v766 = vmul.f32 %v738, 1.442695
        %v767 = vpow.pop %v766
        %v768 = vmul.f32 %v739, 1.442695
        %v769 = vpow.pop %v768
        %v770 = vmul.f32 %v740, 1.442695
        %v771 = vpow.pop %v770
        %v772 = vmul.f32 %v741, 1.442695
        %v773 = vpow.pop %v772
        %v774 = vadd.f32 %v743, 1.0
        %v775 = vadd.f32 %v745, 1.0
        %v776 = vadd.f32 %v747, 1.0
        %v777 = vadd.f32 %v749, 1.0
        %v778 = vadd.f32 %v751, 1.0
        %v779 = vadd.f32 %v753, 1.0
        %v780 = vadd.f32 %v755, 1.0
        %v781 = vadd.f32 %v757, 1.0
        %v782 = vadd.f32 %v759, 1.0
        %v783 = vadd.f32 %v761, 1.0
        %v784 = vadd.f32 %v763, 1.0
        %v785 = vadd.f32 %v765, 1.0
        %v786 = vadd.f32 %v767, 1.0
        %v787 = vadd.f32 %v769, 1.0
        %v788 = vadd.f32 %v771, 1.0
        %v789 = vadd.f32 %v773, 1.0
        %v790 = vrcp.pop %v774
        %v791 = vmul.f32 1.0, %v790
        %v792 = vrcp.pop %v775
        %v793 = vmul.f32 1.0, %v792
        %v794 = vrcp.pop %v776
        %v795 = vmul.f32 1.0, %v794
        %v796 = vrcp.pop %v777
        %v797 = vmul.f32 1.0, %v796
        %v798 = vrcp.pop %v778
        %v799 = vmul.f32 1.0, %v798
        %v800 = vrcp.pop %v779
        %v801 = vmul.f32 1.0, %v800
        %v802 = vrcp.pop %v780
        %v803 = vmul.f32 1.0, %v802
        %v804 = vrcp.pop %v781
        %v805 = vmul.f32 1.0, %v804
        %v806 = vrcp.pop %v782
        %v807 = vmul.f32 1.0, %v806
        %v808 = vrcp.pop %v783
        %v809 = vmul.f32 1.0, %v808
        %v810 = vrcp.pop %v784
        %v811 = vmul.f32 1.0, %v810
        %v812 = vrcp.pop %v785
        %v813 = vmul.f32 1.0, %v812
        %v814 = vrcp.pop %v786
        %v815 = vmul.f32 1.0, %v814
        %v816 = vrcp.pop %v787
        %v817 = vmul.f32 1.0, %v816
        %v818 = vrcp.pop %v788
        %v819 = vmul.f32 1.0, %v818
        %v820 = vrcp.pop %v789
        %v821 = vmul.f32 1.0, %v820
        %v838 = vlaneseq
        %v839 = vshrl.u32 %v838, 7
        %v840 = vsub.s32 %v453, %v839
        %v841 = vrot.slane %v791, %v840
        %v842 = vadd.s32 %v453, 4294967288
        %v843 = vlaneseq
        %v844 = vshrl.u32 %v843, 7
        %v845 = vsub.s32 %v842, %v844
        %v846 = vrot.slane %v793, %v845
        %vm847 = vcmask 130112
        %v848 = vsel %vm847, %v846, %v841
        %v849 = vlaneseq
        %v850 = vshrl.u32 %v849, 7
        %v851 = vsub.s32 %v453, %v850
        %v852 = vrot.slane %v795, %v851
        %v853 = vlaneseq
        %v854 = vshrl.u32 %v853, 7
        %v855 = vsub.s32 %v842, %v854
        %v856 = vrot.slane %v797, %v855
        %v857 = vsel %vm847, %v856, %v852
        %v858 = vlaneseq
        %v859 = vshrl.u32 %v858, 7
        %v860 = vsub.s32 %v453, %v859
        %v861 = vrot.slane %v799, %v860
        %v862 = vlaneseq
        %v863 = vshrl.u32 %v862, 7
        %v864 = vsub.s32 %v842, %v863
        %v865 = vrot.slane %v801, %v864
        %v866 = vsel %vm847, %v865, %v861
        %v867 = vlaneseq
        %v868 = vshrl.u32 %v867, 7
        %v869 = vsub.s32 %v453, %v868
        %v870 = vrot.slane %v803, %v869
        %v871 = vlaneseq
        %v872 = vshrl.u32 %v871, 7
        %v873 = vsub.s32 %v842, %v872
        %v874 = vrot.slane %v805, %v873
        %v875 = vsel %vm847, %v874, %v870
        %v876 = vlaneseq
        %v877 = vshrl.u32 %v876, 7
        %v878 = vsub.s32 %v453, %v877
        %v879 = vrot.slane %v807, %v878
        %v880 = vlaneseq
        %v881 = vshrl.u32 %v880, 7
        %v882 = vsub.s32 %v842, %v881
        %v883 = vrot.slane %v809, %v882
        %v884 = vsel %vm847, %v883, %v879
        %v885 = vlaneseq
        %v886 = vshrl.u32 %v885, 7
        %v887 = vsub.s32 %v453, %v886
        %v888 = vrot.slane %v811, %v887
        %v889 = vlaneseq
        %v890 = vshrl.u32 %v889, 7
        %v891 = vsub.s32 %v842, %v890
        %v892 = vrot.slane %v813, %v891
        %v893 = vsel %vm847, %v892, %v888
        %v894 = vlaneseq
        %v895 = vshrl.u32 %v894, 7
        %v896 = vsub.s32 %v453, %v895
        %v897 = vrot.slane %v815, %v896
        %v898 = vlaneseq
        %v899 = vshrl.u32 %v898, 7
        %v900 = vsub.s32 %v842, %v899
        %v901 = vrot.slane %v817, %v900
        %v902 = vsel %vm847, %v901, %v897
        %v903 = vlaneseq
        %v904 = vshrl.u32 %v903, 7
        %v905 = vsub.s32 %v453, %v904
        %v906 = vrot.slane %v819, %v905
        %v907 = vlaneseq
        %v908 = vshrl.u32 %v907, 7
        %v909 = vsub.s32 %v842, %v908
        %v910 = vrot.slane %v821, %v909
        %v911 = vsel %vm847, %v910, %v906
        %vm912 = vcmask 1041409
        %v913 = vsel %vm912, %v857, %v848
        %vm914 = vcmask 1042434
        %v915 = vsel %vm914, %v866, %v913
        %vm916 = vcmask 1043459
        %v917 = vsel %vm916, %v875, %v915
        %vm918 = vcmask 1044484
        %v919 = vsel %vm918, %v884, %v917
        %vm920 = vcmask 1045509
        %v921 = vsel %vm920, %v893, %v919
        %vm922 = vcmask 1046534
        %v923 = vsel %vm922, %v902, %v921
        %vm924 = vcmask 1047559
        %v925 = vsel %vm924, %v911, %v923
        %927 = vst.msk [vmem:[%s350] sm:$0xff] %vm403, %v925
        %v928 = vcvt.s32.f32 %v500
        %v929 = vcvt.s32.f32 %v515
        %v930 = vcvt.s32.f32 %v530
        %v931 = vcvt.s32.f32 %v545
        %v932 = vcvt.s32.f32 %v560
        %v933 = vcvt.s32.f32 %v575
        %v934 = vcvt.s32.f32 %v590
        %v935 = vcvt.s32.f32 %v605
        %v936 = vcvt.s32.f32 %v620
        %v937 = vcvt.s32.f32 %v635
        %v938 = vcvt.s32.f32 %v650
        %v939 = vcvt.s32.f32 %v665
        %v940 = vcvt.s32.f32 %v680
        %v941 = vcvt.s32.f32 %v695
        %v942 = vcvt.s32.f32 %v710
        %v943 = vcvt.s32.f32 %v725
        %v960 = vlaneseq
        %v961 = vshrl.u32 %v960, 7
        %v962 = vsub.s32 %v453, %v961
        %v963 = vrot.slane %v928, %v962
        %v964 = vlaneseq
        %v965 = vshrl.u32 %v964, 7
        %v966 = vsub.s32 %v842, %v965
        %v967 = vrot.slane %v929, %v966
        %v968 = vsel %vm847, %v967, %v963
        %v969 = vlaneseq
        %v970 = vshrl.u32 %v969, 7
        %v971 = vsub.s32 %v453, %v970
        %v972 = vrot.slane %v930, %v971
        %v973 = vlaneseq
        %v974 = vshrl.u32 %v973, 7
        %v975 = vsub.s32 %v842, %v974
        %v976 = vrot.slane %v931, %v975
        %v977 = vsel %vm847, %v976, %v972
        %v978 = vlaneseq
        %v979 = vshrl.u32 %v978, 7
        %v980 = vsub.s32 %v453, %v979
        %v981 = vrot.slane %v932, %v980
        %v982 = vlaneseq
        %v983 = vshrl.u32 %v982, 7
        %v984 = vsub.s32 %v842, %v983
        %v985 = vrot.slane %v933, %v984
        %v986 = vsel %vm847, %v985, %v981
        %v987 = vlaneseq
        %v988 = vshrl.u32 %v987, 7
        %v989 = vsub.s32 %v453, %v988
        %v990 = vrot.slane %v934, %v989
        %v991 = vlaneseq
        %v992 = vshrl.u32 %v991, 7
        %v993 = vsub.s32 %v842, %v992
        %v994 = vrot.slane %v935, %v993
        %v995 = vsel %vm847, %v994, %v990
        %v996 = vlaneseq
        %v997 = vshrl.u32 %v996, 7
        %v998 = vsub.s32 %v453, %v997
        %v999 = vrot.slane %v936, %v998
        %v1000 = vlaneseq
        %v1001 = vshrl.u32 %v1000, 7
        %v1002 = vsub.s32 %v842, %v1001
        %v1003 = vrot.slane %v937, %v1002
        %v1004 = vsel %vm847, %v1003, %v999
        %v1005 = vlaneseq
        %v1006 = vshrl.u32 %v1005, 7
        %v1007 = vsub.s32 %v453, %v1006
        %v1008 = vrot.slane %v938, %v1007
        %v1009 = vlaneseq
        %v1010 = vshrl.u32 %v1009, 7
        %v1011 = vsub.s32 %v842, %v1010
        %v1012 = vrot.slane %v939, %v1011
        %v1013 = vsel %vm847, %v1012, %v1008
        %v1014 = vlaneseq
        %v1015 = vshrl.u32 %v1014, 7
        %v1016 = vsub.s32 %v453, %v1015
        %v1017 = vrot.slane %v940, %v1016
        %v1018 = vlaneseq
        %v1019 = vshrl.u32 %v1018, 7
        %v1020 = vsub.s32 %v842, %v1019
        %v1021 = vrot.slane %v941, %v1020
        %v1022 = vsel %vm847, %v1021, %v1017
        %v1023 = vlaneseq
        %v1024 = vshrl.u32 %v1023, 7
        %v1025 = vsub.s32 %v453, %v1024
        %v1026 = vrot.slane %v942, %v1025
        %v1027 = vlaneseq
        %v1028 = vshrl.u32 %v1027, 7
        %v1029 = vsub.s32 %v842, %v1028
        %v1030 = vrot.slane %v943, %v1029
        %v1031 = vsel %vm847, %v1030, %v1026
        %v1032 = vsel %vm912, %v977, %v968
        %v1033 = vsel %vm914, %v986, %v1032
        %v1034 = vsel %vm916, %v995, %v1033
        %v1035 = vsel %vm918, %v1004, %v1034
        %v1036 = vsel %vm920, %v1013, %v1035
        %v1037 = vsel %vm922, %v1022, %v1036
        %v1038 = vsel %vm924, %v1031, %v1037
        %1040 = vst.msk [vmem:[%s357] sm:$0xff] %vm403, %v1038
        %v1041 = vmax.f32 %v404, %v407
        %v1042 = vrot.slane %v1041, 4
        %v1043 = vmax.f32 %v1041, %v1042
        %v1044 = vrot.slane %v1043, 2
        %v1045 = vmax.f32 %v1043, %v1044
        %v1046 = vrot.slane %v1045, 1
        %v1047 = vmax.f32 %v1045, %v1046
        %v1048 = vmax.f32 %v410, %v413
        %v1049 = vrot.slane %v1048, 4
        %v1050 = vmax.f32 %v1048, %v1049
        %v1051 = vrot.slane %v1050, 2
        %v1052 = vmax.f32 %v1050, %v1051
        %v1053 = vrot.slane %v1052, 1
        %v1054 = vmax.f32 %v1052, %v1053
        %v1055 = vmax.f32 %v416, %v419
        %v1056 = vrot.slane %v1055, 4
        %v1057 = vmax.f32 %v1055, %v1056
        %v1058 = vrot.slane %v1057, 2
        %v1059 = vmax.f32 %v1057, %v1058
        %v1060 = vrot.slane %v1059, 1
        %v1061 = vmax.f32 %v1059, %v1060
        %v1062 = vmax.f32 %v422, %v425
        %v1063 = vrot.slane %v1062, 4
        %v1064 = vmax.f32 %v1062, %v1063
        %v1065 = vrot.slane %v1064, 2
        %v1066 = vmax.f32 %v1064, %v1065
        %v1067 = vrot.slane %v1066, 1
        %v1068 = vmax.f32 %v1066, %v1067
        %v1069 = vmax.f32 %v428, %v431
        %v1070 = vrot.slane %v1069, 4
        %v1071 = vmax.f32 %v1069, %v1070
        %v1072 = vrot.slane %v1071, 2
        %v1073 = vmax.f32 %v1071, %v1072
        %v1074 = vrot.slane %v1073, 1
        %v1075 = vmax.f32 %v1073, %v1074
        %v1076 = vmax.f32 %v434, %v437
        %v1077 = vrot.slane %v1076, 4
        %v1078 = vmax.f32 %v1076, %v1077
        %v1079 = vrot.slane %v1078, 2
        %v1080 = vmax.f32 %v1078, %v1079
        %v1081 = vrot.slane %v1080, 1
        %v1082 = vmax.f32 %v1080, %v1081
        %v1083 = vmax.f32 %v440, %v443
        %v1084 = vrot.slane %v1083, 4
        %v1085 = vmax.f32 %v1083, %v1084
        %v1086 = vrot.slane %v1085, 2
        %v1087 = vmax.f32 %v1085, %v1086
        %v1088 = vrot.slane %v1087, 1
        %v1089 = vmax.f32 %v1087, %v1088
        %v1090 = vmax.f32 %v446, %v449
        %v1091 = vrot.slane %v1090, 4
        %v1092 = vmax.f32 %v1090, %v1091
        %v1093 = vrot.slane %v1092, 2
        %v1094 = vmax.f32 %v1092, %v1093
        %v1095 = vrot.slane %v1094, 1
        %v1096 = vmax.f32 %v1094, %v1095
        %v1097 = vlaneseq
        %v1098 = vshrl.u32 %v1097, 7
        %v1099 = vadd.s32 %v1098, 8
        %vm1100 = vcmp.eq.f32.partialorder %v387, %v1047
        %vm1101 = vcmp.eq.f32.partialorder %v388, %v1047
        %vm1102 = vcmp.eq.f32.partialorder %v389, %v1054
        %vm1103 = vcmp.eq.f32.partialorder %v390, %v1054
        %vm1104 = vcmp.eq.f32.partialorder %v391, %v1061
        %vm1105 = vcmp.eq.f32.partialorder %v392, %v1061
        %vm1106 = vcmp.eq.f32.partialorder %v393, %v1068
        %vm1107 = vcmp.eq.f32.partialorder %v394, %v1068
        %vm1108 = vcmp.eq.f32.partialorder %v395, %v1075
        %vm1109 = vcmp.eq.f32.partialorder %v396, %v1075
        %vm1110 = vcmp.eq.f32.partialorder %v397, %v1082
        %vm1111 = vcmp.eq.f32.partialorder %v398, %v1082
        %vm1112 = vcmp.eq.f32.partialorder %v399, %v1089
        %vm1113 = vcmp.eq.f32.partialorder %v400, %v1089
        %vm1114 = vcmp.eq.f32.partialorder %v401, %v1096
        %vm1115 = vcmp.eq.f32.partialorder %v402, %v1096
        %v1116 = vsel %vm1100, %v1098, 1073741824
        %v1117 = vsel %vm1101, %v1099, 1073741824
        %v1118 = vsel %vm1102, %v1098, 1073741824
        %v1119 = vsel %vm1103, %v1099, 1073741824
        %v1120 = vsel %vm1104, %v1098, 1073741824
        %v1121 = vsel %vm1105, %v1099, 1073741824
        %v1122 = vsel %vm1106, %v1098, 1073741824
        %v1123 = vsel %vm1107, %v1099, 1073741824
        %v1124 = vsel %vm1108, %v1098, 1073741824
        %v1125 = vsel %vm1109, %v1099, 1073741824
        %v1126 = vsel %vm1110, %v1098, 1073741824
        %v1127 = vsel %vm1111, %v1099, 1073741824
        %v1128 = vsel %vm1112, %v1098, 1073741824
        %v1129 = vsel %vm1113, %v1099, 1073741824
        %v1130 = vsel %vm1114, %v1098, 1073741824
        %v1131 = vsel %vm1115, %v1099, 1073741824
        %v1132 = vsel %vm403, %v1116, 2147483647
        %v1133 = vsel %vm403, %v1117, 2147483647
        %vm1134 = vcmp.lt.s32.totalorder %v1132, %v1133
        %v1135 = vsel %vm1134, %v1132, %v1133
        %v1136 = vrot.slane %v1135, 4
        %vm1137 = vcmp.lt.s32.totalorder %v1135, %v1136
        %v1138 = vsel %vm1137, %v1135, %v1136
        %v1139 = vrot.slane %v1138, 2
        %vm1140 = vcmp.lt.s32.totalorder %v1138, %v1139
        %v1141 = vsel %vm1140, %v1138, %v1139
        %v1142 = vrot.slane %v1141, 1
        %vm1143 = vcmp.lt.s32.totalorder %v1141, %v1142
        %v1144 = vsel %vm1143, %v1141, %v1142
        %v1145 = vsel %vm403, %v1118, 2147483647
        %v1146 = vsel %vm403, %v1119, 2147483647
        %vm1147 = vcmp.lt.s32.totalorder %v1145, %v1146
        %v1148 = vsel %vm1147, %v1145, %v1146
        %v1149 = vrot.slane %v1148, 4
        %vm1150 = vcmp.lt.s32.totalorder %v1148, %v1149
        %v1151 = vsel %vm1150, %v1148, %v1149
        %v1152 = vrot.slane %v1151, 2
        %vm1153 = vcmp.lt.s32.totalorder %v1151, %v1152
        %v1154 = vsel %vm1153, %v1151, %v1152
        %v1155 = vrot.slane %v1154, 1
        %vm1156 = vcmp.lt.s32.totalorder %v1154, %v1155
        %v1157 = vsel %vm1156, %v1154, %v1155
        %v1158 = vsel %vm403, %v1120, 2147483647
        %v1159 = vsel %vm403, %v1121, 2147483647
        %vm1160 = vcmp.lt.s32.totalorder %v1158, %v1159
        %v1161 = vsel %vm1160, %v1158, %v1159
        %v1162 = vrot.slane %v1161, 4
        %vm1163 = vcmp.lt.s32.totalorder %v1161, %v1162
        %v1164 = vsel %vm1163, %v1161, %v1162
        %v1165 = vrot.slane %v1164, 2
        %vm1166 = vcmp.lt.s32.totalorder %v1164, %v1165
        %v1167 = vsel %vm1166, %v1164, %v1165
        %v1168 = vrot.slane %v1167, 1
        %vm1169 = vcmp.lt.s32.totalorder %v1167, %v1168
        %v1170 = vsel %vm1169, %v1167, %v1168
        %v1171 = vsel %vm403, %v1122, 2147483647
        %v1172 = vsel %vm403, %v1123, 2147483647
        %vm1173 = vcmp.lt.s32.totalorder %v1171, %v1172
        %v1174 = vsel %vm1173, %v1171, %v1172
        %v1175 = vrot.slane %v1174, 4
        %vm1176 = vcmp.lt.s32.totalorder %v1174, %v1175
        %v1177 = vsel %vm1176, %v1174, %v1175
        %v1178 = vrot.slane %v1177, 2
        %vm1179 = vcmp.lt.s32.totalorder %v1177, %v1178
        %v1180 = vsel %vm1179, %v1177, %v1178
        %v1181 = vrot.slane %v1180, 1
        %vm1182 = vcmp.lt.s32.totalorder %v1180, %v1181
        %v1183 = vsel %vm1182, %v1180, %v1181
        %v1184 = vsel %vm403, %v1124, 2147483647
        %v1185 = vsel %vm403, %v1125, 2147483647
        %vm1186 = vcmp.lt.s32.totalorder %v1184, %v1185
        %v1187 = vsel %vm1186, %v1184, %v1185
        %v1188 = vrot.slane %v1187, 4
        %vm1189 = vcmp.lt.s32.totalorder %v1187, %v1188
        %v1190 = vsel %vm1189, %v1187, %v1188
        %v1191 = vrot.slane %v1190, 2
        %vm1192 = vcmp.lt.s32.totalorder %v1190, %v1191
        %v1193 = vsel %vm1192, %v1190, %v1191
        %v1194 = vrot.slane %v1193, 1
        %vm1195 = vcmp.lt.s32.totalorder %v1193, %v1194
        %v1196 = vsel %vm1195, %v1193, %v1194
        %v1197 = vsel %vm403, %v1126, 2147483647
        %v1198 = vsel %vm403, %v1127, 2147483647
        %vm1199 = vcmp.lt.s32.totalorder %v1197, %v1198
        %v1200 = vsel %vm1199, %v1197, %v1198
        %v1201 = vrot.slane %v1200, 4
        %vm1202 = vcmp.lt.s32.totalorder %v1200, %v1201
        %v1203 = vsel %vm1202, %v1200, %v1201
        %v1204 = vrot.slane %v1203, 2
        %vm1205 = vcmp.lt.s32.totalorder %v1203, %v1204
        %v1206 = vsel %vm1205, %v1203, %v1204
        %v1207 = vrot.slane %v1206, 1
        %vm1208 = vcmp.lt.s32.totalorder %v1206, %v1207
        %v1209 = vsel %vm1208, %v1206, %v1207
        %v1210 = vsel %vm403, %v1128, 2147483647
        %v1211 = vsel %vm403, %v1129, 2147483647
        %vm1212 = vcmp.lt.s32.totalorder %v1210, %v1211
        %v1213 = vsel %vm1212, %v1210, %v1211
        %v1214 = vrot.slane %v1213, 4
        %vm1215 = vcmp.lt.s32.totalorder %v1213, %v1214
        %v1216 = vsel %vm1215, %v1213, %v1214
        %v1217 = vrot.slane %v1216, 2
        %vm1218 = vcmp.lt.s32.totalorder %v1216, %v1217
        %v1219 = vsel %vm1218, %v1216, %v1217
        %v1220 = vrot.slane %v1219, 1
        %vm1221 = vcmp.lt.s32.totalorder %v1219, %v1220
        %v1222 = vsel %vm1221, %v1219, %v1220
        %v1223 = vsel %vm403, %v1130, 2147483647
        %v1224 = vsel %vm403, %v1131, 2147483647
        %vm1225 = vcmp.lt.s32.totalorder %v1223, %v1224
        %v1226 = vsel %vm1225, %v1223, %v1224
        %v1227 = vrot.slane %v1226, 4
        %vm1228 = vcmp.lt.s32.totalorder %v1226, %v1227
        %v1229 = vsel %vm1228, %v1226, %v1227
        %v1230 = vrot.slane %v1229, 2
        %vm1231 = vcmp.lt.s32.totalorder %v1229, %v1230
        %v1232 = vsel %vm1231, %v1229, %v1230
        %v1233 = vrot.slane %v1232, 1
        %vm1234 = vcmp.lt.s32.totalorder %v1232, %v1233
        %v1235 = vsel %vm1234, %v1232, %v1233
        %v1236 = vxor.u32 %v1047, 2147483648
        %v1237 = vxor.u32 %v1054, 2147483648
        %v1238 = vxor.u32 %v1061, 2147483648
        %v1239 = vxor.u32 %v1068, 2147483648
        %v1240 = vxor.u32 %v1075, 2147483648
        %v1241 = vxor.u32 %v1082, 2147483648
        %v1242 = vxor.u32 %v1089, 2147483648
        %v1243 = vxor.u32 %v1096, 2147483648
        %v1244 = vmul.f32 %v1236, 1.442695
        %v1245 = vpow.pop %v1244
        %v1246 = vmul.f32 %v1237, 1.442695
        %v1247 = vpow.pop %v1246
        %v1248 = vmul.f32 %v1238, 1.442695
        %v1249 = vpow.pop %v1248
        %v1250 = vmul.f32 %v1239, 1.442695
        %v1251 = vpow.pop %v1250
        %v1252 = vmul.f32 %v1240, 1.442695
        %v1253 = vpow.pop %v1252
        %v1254 = vmul.f32 %v1241, 1.442695
        %v1255 = vpow.pop %v1254
        %v1256 = vmul.f32 %v1242, 1.442695
        %v1257 = vpow.pop %v1256
        %v1258 = vmul.f32 %v1243, 1.442695
        %v1259 = vpow.pop %v1258
        %v1260 = vadd.f32 %v1245, 1.0
        %v1261 = vadd.f32 %v1247, 1.0
        %v1262 = vadd.f32 %v1249, 1.0
        %v1263 = vadd.f32 %v1251, 1.0
        %v1264 = vadd.f32 %v1253, 1.0
        %v1265 = vadd.f32 %v1255, 1.0
        %v1266 = vadd.f32 %v1257, 1.0
        %v1267 = vadd.f32 %v1259, 1.0
        %v1268 = vrcp.pop %v1260
        %v1269 = vmul.f32 1.0, %v1268
        %v1270 = vrcp.pop %v1261
        %v1271 = vmul.f32 1.0, %v1270
        %v1272 = vrcp.pop %v1262
        %v1273 = vmul.f32 1.0, %v1272
        %v1274 = vrcp.pop %v1263
        %v1275 = vmul.f32 1.0, %v1274
        %v1276 = vrcp.pop %v1264
        %v1277 = vmul.f32 1.0, %v1276
        %v1278 = vrcp.pop %v1265
        %v1279 = vmul.f32 1.0, %v1278
        %v1280 = vrcp.pop %v1266
        %v1281 = vmul.f32 1.0, %v1280
        %v1282 = vrcp.pop %v1267
        %v1283 = vmul.f32 1.0, %v1282
        %v1292 = vsel %vm912, %v1271, %v1269
        %v1293 = vsel %vm914, %v1273, %v1292
        %v1294 = vsel %vm916, %v1275, %v1293
        %v1295 = vsel %vm918, %v1277, %v1294
        %v1296 = vsel %vm920, %v1279, %v1295
        %v1297 = vsel %vm922, %v1281, %v1296
        %v1298 = vsel %vm924, %v1283, %v1297
        %1300 = vst.msk [vmem:[%s364] sm:$0xff] %vm403, %v1298
        %v1301 = vcvt.s32.f32 %v1144
        %v1302 = vcvt.s32.f32 %v1157
        %v1303 = vcvt.s32.f32 %v1170
        %v1304 = vcvt.s32.f32 %v1183
        %v1305 = vcvt.s32.f32 %v1196
        %v1306 = vcvt.s32.f32 %v1209
        %v1307 = vcvt.s32.f32 %v1222
        %v1308 = vcvt.s32.f32 %v1235
        %v1317 = vsel %vm912, %v1302, %v1301
        %v1318 = vsel %vm914, %v1303, %v1317
        %v1319 = vsel %vm916, %v1304, %v1318
        %v1320 = vsel %vm918, %v1305, %v1319
        %v1321 = vsel %vm920, %v1306, %v1320
        %v1322 = vsel %vm922, %v1307, %v1321
        %v1323 = vsel %vm924, %v1308, %v1322
        %1325 = vst.msk [vmem:[%s371] sm:$0xff] %vm403, %v1323
        %s1326 = sand.u32 %s111, 1
        %s1327 = scalar_lea.sflag [#allocation4], %s1326
        %s1328 = sand.u32 %s111, 1
        %s1329 = smul.addr %s1328, 8
        %s1330 = scalar_lea.vmem [#allocation7], %s1329
        %s1331 = sand.u32 %s33, 1
        %s1332 = scalar_lea.sflag [#allocation9], %s1331
        %s1333 = sand.u32 %s139, 1
        %s1334 = smul.addr %s1333, 8
        %s1335 = scalar_lea.vmem [#allocation8], %s1334
        %s1336 = sand.u32 %s33, 1
        %s1337 = scalar_lea.sflag [#allocation9], %s1336
        %s1338 = sand.u32 %s167, 1
        %s1339 = smul.addr %s1338, 8
        %s1340 = scalar_lea.vmem [#allocation10], %s1339
        %s1341 = sand.u32 %s33, 1
        %s1342 = scalar_lea.sflag [#allocation12], %s1341
        %s1343 = sand.u32 %s195, 1
        %s1344 = smul.addr %s1343, 8
        %s1345 = scalar_lea.vmem [#allocation11], %s1344
        %s1346 = sand.u32 %s33, 1
        %s1347 = scalar_lea.sflag [#allocation12], %s1346
        %s1348 = sand.u32 %s223, 1
        %s1349 = smul.addr %s1348, 8
        %s1350 = scalar_lea.vmem [#allocation13], %s1349
        // Predicated region
        $region37: #{tpu_custom_call.1} parent=27 // pred_check
          %p1351 = pneg %p121
        $region38: #{tpu_custom_call.1} parent=27 // pred_check_branch
          %1353 = sbr.rel (%p1351) target = $region40
        $region39: #{tpu_custom_call.1} parent=27 // pred_region
          %s1355 = ssub.s32 128, 128
          %1356 = vsyncadd %s1327, %s1355
          %s1357 = sadd.s32 %s38, %s37
          %s1358 = smul.addr %s1357, 128
          %s1359 = scalar_lea.hbm %s2, %s1358
          %s1361 = sshll.u32 %s1330, 4
          %s1362 = int_to_ptr.vmem [resolvable:$true] %s1361
          %1364 = dma.vmem_to_hbm [thread:$0]  %s1362, 128, %s1359, %s1327
        $region40: #{tpu_custom_call.1} parent=27 // pred_fallthru
          _
        // Predicated region
        $region41: #{tpu_custom_call.1} parent=27 // pred_check
          %p1365 = pneg %p149
        $region42: #{tpu_custom_call.1} parent=27 // pred_check_branch
          %1367 = sbr.rel (%p1365) target = $region44
        $region43: #{tpu_custom_call.1} parent=27 // pred_region
          %s1369 = ssub.s32 128, 128
          %1370 = vsyncadd %s1332, %s1369
          %s1371 = sadd.s32 %s38, %s37
          %s1372 = smul.addr %s1371, 128
          %s1373 = scalar_lea.hbm %s3, %s1372
          %s1375 = sshll.u32 %s1335, 4
          %s1376 = int_to_ptr.vmem [resolvable:$true] %s1375
          %1378 = dma.vmem_to_hbm [thread:$0]  %s1376, 128, %s1373, %s1332
        $region44: #{tpu_custom_call.1} parent=27 // pred_fallthru
          _
        // Predicated region
        $region45: #{tpu_custom_call.1} parent=27 // pred_check
          %p1379 = pneg %p177
        $region46: #{tpu_custom_call.1} parent=27 // pred_check_branch
          %1381 = sbr.rel (%p1379) target = $region48
        $region47: #{tpu_custom_call.1} parent=27 // pred_region
          %s1383 = ssub.s32 128, 128
          %1384 = vsyncadd %s1337, %s1383
          %s1385 = sadd.s32 %s38, %s37
          %s1386 = smul.addr %s1385, 128
          %s1387 = scalar_lea.hbm %s4, %s1386
          %s1389 = sshll.u32 %s1340, 4
          %s1390 = int_to_ptr.vmem [resolvable:$true] %s1389
          %1392 = dma.vmem_to_hbm [thread:$0]  %s1390, 128, %s1387, %s1337
        $region48: #{tpu_custom_call.1} parent=27 // pred_fallthru
          _
        // Predicated region
        $region49: #{tpu_custom_call.1} parent=27 // pred_check
          %p1393 = pneg %p205
        $region50: #{tpu_custom_call.1} parent=27 // pred_check_branch
          %1395 = sbr.rel (%p1393) target = $region52
        $region51: #{tpu_custom_call.1} parent=27 // pred_region
          %s1397 = ssub.s32 128, 128
          %1398 = vsyncadd %s1342, %s1397
          %s1399 = sadd.s32 %s38, %s37
          %s1400 = smul.addr %s1399, 128
          %s1401 = scalar_lea.hbm %s5, %s1400
          %s1403 = sshll.u32 %s1345, 4
          %s1404 = int_to_ptr.vmem [resolvable:$true] %s1403
          %1406 = dma.vmem_to_hbm [thread:$0]  %s1404, 128, %s1401, %s1342
        $region52: #{tpu_custom_call.1} parent=27 // pred_fallthru
          _
        // Predicated region
        $region53: #{tpu_custom_call.1} parent=27 // pred_check
          %p1407 = pneg %p233
        $region54: #{tpu_custom_call.1} parent=27 // pred_check_branch
          %1409 = sbr.rel (%p1407) target = $region56
        $region55: #{tpu_custom_call.1} parent=27 // pred_region
          %s1411 = ssub.s32 128, 128
          %1412 = vsyncadd %s1347, %s1411
          %s1413 = sadd.s32 %s38, %s37
          %s1414 = smul.addr %s1413, 128
          %s1415 = scalar_lea.hbm %s6, %s1414
          %s1417 = sshll.u32 %s1350, 4
          %s1418 = int_to_ptr.vmem [resolvable:$true] %s1417
          %1420 = dma.vmem_to_hbm [thread:$0]  %s1418, 128, %s1415, %s1347
        $region56: #{tpu_custom_call.1} parent=27 // pred_fallthru
          _
      $region28: #{tpu_custom_call.1} parent=5 // pred_fallthru
        _
      %p1421 = scmp.le.s32.totalorder 2, %s28
      // Predicated region
      $region57: #{tpu_custom_call.1} parent=5 // pred_check
        %p1422 = pneg %p1421
      $region58: #{tpu_custom_call.1} parent=5 // pred_check_branch
        %1424 = sbr.rel (%p1422) target = $region60
      $region59: #{tpu_custom_call.1} parent=5 // pred_region
        %s1425 = ssub.s32 %s28, 2
        // Predicated region
        $region61: #{tpu_custom_call.1} parent=59 // pred_check
          %p1426 = pneg %p127
        $region62: #{tpu_custom_call.1} parent=59 // pred_check_branch
          %1428 = sbr.rel (%p1426) target = $region64
        $region63: #{tpu_custom_call.1} parent=59 // pred_region
          %s1429 = sand.u32 %s112, 1
          %s1430 = scalar_lea.sflag [#allocation4], %s1429
          %s1431 = sand.u32 %s112, 1
          %s1432 = smul.addr %s1431, 8
          %s1433 = scalar_lea.vmem [#allocation7], %s1432
          %1434 = dma.done %s1430, 128
        $region64: #{tpu_custom_call.1} parent=59 // pred_fallthru
          _
        // Predicated region
        $region65: #{tpu_custom_call.1} parent=59 // pred_check
          %p1435 = pneg %p155
        $region66: #{tpu_custom_call.1} parent=59 // pred_check_branch
          %1437 = sbr.rel (%p1435) target = $region68
        $region67: #{tpu_custom_call.1} parent=59 // pred_region
          %s1438 = sand.u32 %s34, 1
          %s1439 = scalar_lea.sflag [#allocation9], %s1438
          %s1440 = sand.u32 %s140, 1
          %s1441 = smul.addr %s1440, 8
          %s1442 = scalar_lea.vmem [#allocation8], %s1441
          %1443 = dma.done %s1439, 128
        $region68: #{tpu_custom_call.1} parent=59 // pred_fallthru
          _
        // Predicated region
        $region69: #{tpu_custom_call.1} parent=59 // pred_check
          %p1444 = pneg %p183
        $region70: #{tpu_custom_call.1} parent=59 // pred_check_branch
          %1446 = sbr.rel (%p1444) target = $region72
        $region71: #{tpu_custom_call.1} parent=59 // pred_region
          %s1447 = sand.u32 %s34, 1
          %s1448 = scalar_lea.sflag [#allocation9], %s1447
          %s1449 = sand.u32 %s168, 1
          %s1450 = smul.addr %s1449, 8
          %s1451 = scalar_lea.vmem [#allocation10], %s1450
          %1452 = dma.done %s1448, 128
        $region72: #{tpu_custom_call.1} parent=59 // pred_fallthru
          _
        // Predicated region
        $region73: #{tpu_custom_call.1} parent=59 // pred_check
          %p1453 = pneg %p211
        $region74: #{tpu_custom_call.1} parent=59 // pred_check_branch
          %1455 = sbr.rel (%p1453) target = $region76
        $region75: #{tpu_custom_call.1} parent=59 // pred_region
          %s1456 = sand.u32 %s34, 1
          %s1457 = scalar_lea.sflag [#allocation12], %s1456
          %s1458 = sand.u32 %s196, 1
          %s1459 = smul.addr %s1458, 8
          %s1460 = scalar_lea.vmem [#allocation11], %s1459
          %1461 = dma.done %s1457, 128
        $region76: #{tpu_custom_call.1} parent=59 // pred_fallthru
          _
        // Predicated region
        $region77: #{tpu_custom_call.1} parent=59 // pred_check
          %p1462 = pneg %p239
        $region78: #{tpu_custom_call.1} parent=59 // pred_check_branch
          %1464 = sbr.rel (%p1462) target = $region80
        $region79: #{tpu_custom_call.1} parent=59 // pred_region
          %s1465 = sand.u32 %s34, 1
          %s1466 = scalar_lea.sflag [#allocation12], %s1465
          %s1467 = sand.u32 %s224, 1
          %s1468 = smul.addr %s1467, 8
          %s1469 = scalar_lea.vmem [#allocation13], %s1468
          %1470 = dma.done %s1466, 128
        $region80: #{tpu_custom_call.1} parent=59 // pred_fallthru
          _
      $region60: #{tpu_custom_call.1} parent=5 // pred_fallthru
        _
    $region6: #{tpu_custom_call.1} parent=1 // loop_footer
      %s32 = sadd.s32 1, %s28
    $region7: #{tpu_custom_call.1} parent=1 // loop_footer_branch
      %27 = sbr.rel target = $region3
    $region8: #{tpu_custom_call.1} parent=1 // loop_exit
      _
    %1471 = vsyncpa [#allocation3], 1
    %s1472 = scalar_lea.sflag [#allocation3], 1
    %1473 = vsyncpa %s1472, 1
    %1474 = vsyncpa [#allocation6], 1
    %s1475 = scalar_lea.sflag [#allocation6], 1
    %1476 = vsyncpa %s1475, 1
    %1477 = vsyncpa [#allocation4], 1
    %s1478 = scalar_lea.sflag [#allocation4], 1
    %1479 = vsyncpa %s1478, 1
    %1480 = vsyncpa [#allocation9], 1
    %s1481 = scalar_lea.sflag [#allocation9], 1
    %1482 = vsyncpa %s1481, 1
    %1483 = vsyncpa [#allocation12], 1
    %s1484 = scalar_lea.sflag [#allocation12], 1
    %1485 = vsyncpa %s1484, 1

</llo_original>
